<compile_context>
chip_gen: v5e
topology: v5e:2x2
jax: 0.10.0
libtpu: 0.0.40
codegen_flags: <defaults>
</compile_context>

<pallas_src>
import functools
import math

import jax
import jax.numpy as jnp
from jax.experimental import pallas as pl
from jax.experimental.pallas import tpu as pltpu


# --------------------------------------------------------------------------- #
# Kernel
# --------------------------------------------------------------------------- #
def bert_attention_kernel(x_ref, mask_ref, wq_ref, bq_ref, wkv_ref, bkv_ref,
                          wo_ref, bo_ref, gamma_ref, beta_ref, out_ref,
                          kT_scr, vT_scr, *, num_heads, head_dim, q_tile, eps):
    H = num_heads * head_dim
    S = kT_scr.shape[-1]
    qt = pl.program_id(1)

    # ---- once per batch row: fused K/V projection staged head-major & lane-dense.
    # K^T / V^T are computed directly as (2H, S) = W_kv @ x^T, so splitting into
    # (NH, d, S) is a leading-dim reshape only (no per-head slice loop, no lane
    # padding of the head_dim axis, unmasked scratch stores).
    @pl.when(qt == 0)
    def _():
        xT = x_ref[0].astype(jnp.float32).T.astype(jnp.bfloat16)          # (H, S)
        kvT = jnp.dot(wkv_ref[...], xT,
                      preferred_element_type=jnp.float32) + bkv_ref[...]  # (2H, S) f32
        kT_scr[...] = kvT[:H].reshape(num_heads, head_dim, S).astype(jnp.bfloat16)
        vT_scr[...] = kvT[H:].reshape(num_heads, head_dim, S).astype(jnp.bfloat16)

    # ---- per query tile ----
    row0 = pl.multiple_of(qt * q_tile, q_tile)
    x_tile = x_ref[0, pl.ds(row0, q_tile), :]                             # (tq, H)
    x_f32 = x_tile.astype(jnp.float32)

    # Q projection (1/sqrt(d) pre-folded into the weight/bias), computed transposed
    # so the head-major relayout is a leading-dim reshape + batched minor swap.
    xT_tile = x_f32.T.astype(jnp.bfloat16)                                # (H, tq)
    qT = jnp.dot(wq_ref[...], xT_tile,
                 preferred_element_type=jnp.float32) + bq_ref[...]        # (H, tq) f32
    q_hqd = jnp.swapaxes(qT.reshape(num_heads, head_dim, q_tile),
                         1, 2).astype(jnp.bfloat16)                       # (NH, tq, d)

    mask = mask_ref[0, 0].astype(jnp.float32)                             # (S,) additive

    scores = jnp.einsum("hqd,hdk->hqk", q_hqd, kT_scr[...],
                        preferred_element_type=jnp.float32)               # (NH, tq, S)
    scores = scores + mask[None, None, :]

    # Numerically-stable softmax over keys (f32 statistics; EUP approx reciprocal
    # for the denominator — documented small relative error vs exact softmax).
    # TODO(synk): on v6e/v7x the exp could run in bf16 (bf16 EUP ~2x) — kept f32 for
    # v5e portability.
    scores = scores - jnp.max(scores, axis=-1, keepdims=True)
    probs = jnp.exp(scores)
    probs = probs * pl.reciprocal(jnp.sum(probs, axis=-1, keepdims=True), approx=True)
    # Attention-probs / hidden dropout are identity in eval mode (omitted).

    ctx = jnp.einsum("hqk,hdk->hqd", probs.astype(jnp.bfloat16), vT_scr[...],
                     preferred_element_type=jnp.float32)                  # (NH, tq, d)

    # BertSelfOutput: single merged (tq,H)x(H,H) output projection (no per-head
    # K=head_dim matmuls, no dependent-add chain), then residual + LayerNorm.
    ctx_2d = jnp.swapaxes(ctx, 1, 2).reshape(H, q_tile).T.astype(jnp.bfloat16)  # (tq, H)
    y = x_f32 + bo_ref[0] + jnp.dot(ctx_2d, wo_ref[...],
                                    preferred_element_type=jnp.float32)

    mean = jnp.mean(y, axis=-1, keepdims=True)
    var = jnp.mean(jnp.square(y - mean), axis=-1, keepdims=True)
    y = (y - mean) * jax.lax.rsqrt(var + eps)                             # exact rsqrt
    out_ref[0] = (y * gamma_ref[0] + beta_ref[0]).astype(out_ref.dtype)


# --------------------------------------------------------------------------- #
# Host-side helpers
# --------------------------------------------------------------------------- #
def prepare_bert_attention_params(params, *, num_heads):
    """Hoisted (per-model) weight prep: fold 1/sqrt(d) into Q, fuse K/V, cast
    matmul operands to bf16, shape biases for the transposed-projection trick."""
    H = params["wq"].shape[0]
    head_dim = H // num_heads
    scale = 1.0 / math.sqrt(head_dim)
    # nn.Linear computes x @ W.T + b; we compute projections transposed (W @ x^T),
    # so the raw (H_out, H_in) weights are used un-transposed for Q/K/V.
    w_q = (params["wq"] * scale).astype(jnp.bfloat16)                     # (H, H)
    b_q = (params["bq"] * scale).reshape(H, 1).astype(jnp.float32)
    w_kv = jnp.concatenate([params["wk"], params["wv"]], axis=0).astype(jnp.bfloat16)  # (2H, H)
    b_kv = jnp.concatenate([params["bk"], params["bv"]]).reshape(2 * H, 1).astype(jnp.float32)
    w_o = params["wo"].T.astype(jnp.bfloat16)                             # (H, H)
    b_o = params["bo"].reshape(1, H).astype(jnp.float32)
    gamma = params["gamma"].reshape(1, H).astype(jnp.float32)
    beta = params["beta"].reshape(1, H).astype(jnp.float32)
    return dict(w_q=w_q, b_q=b_q, w_kv=w_kv, b_kv=b_kv, w_o=w_o, b_o=b_o,
                gamma=gamma, beta=beta)


def _round_up(n, m):
    return ((n + m - 1) // m) * m


@functools.lru_cache(maxsize=1)
def _vmem_capacity_bytes():
    try:
        return int(getattr(pltpu.get_tpu_info(), "vmem_capacity_bytes",
                           64 * 1024 * 1024))
    except Exception:  # hardware query unavailable -> assume the smallest (v7x, 64 MiB)
        return 64 * 1024 * 1024


@functools.lru_cache(maxsize=1)
def _single_buffered_constants_supported():
    """One-time feature probe (no silent fallback around the real kernel): does this
    jax/backend accept pl.Buffered(1) single-buffering of a constant operand?"""
    if not hasattr(pl, "Buffered"):
        return False

    def _copy(x_ref, o_ref):
        o_ref[...] = x_ref[...]

    try:
        spec = pl.BlockSpec((8, 128), lambda i: (0, 0), pipeline_mode=pl.Buffered(1))
        out = pl.pallas_call(
            _copy,
            out_shape=jax.ShapeDtypeStruct((8, 128), jnp.float32),
            grid=(1,),
            in_specs=[spec],
            out_specs=pl.BlockSpec((8, 128), lambda i: (0, 0)),
        )(jnp.ones((8, 128), jnp.float32))
        jax.block_until_ready(out)
        return bool(jnp.all(out == 1.0))
    except Exception:  # deliberately scoped to this tiny known-good probe kernel
        return False


def _pick_q_tile(S, max_tile):
    """Largest lane/sublane-friendly query tile: S itself when small, otherwise the
    largest multiple-of-8 divisor of S <= max_tile (never a huge full-S tile)."""
    if S <= max_tile:
        return S
    for t in range(max_tile - max_tile % 8, 0, -8):
        if S % t == 0:
            return t
    # TODO(synk): pad S to a multiple of 8 in the wrapper instead of a full-S tile
    # (only reachable when S has no multiple-of-8 divisor, e.g. odd S).
    return S


def _estimate_vmem_limit_bytes(S, H, NH, d, q_tile, x_bytes, single_buffered):
    """Rough (8,128)-padded VMEM requirement with headroom, capped well below the
    physical per-TensorCore capacity (v7x has only 64 MiB)."""
    lane = lambda n: _round_up(max(int(n), 1), 128)
    sub = lambda n: _round_up(max(int(n), 1), 8)
    wbuf = 1 if single_buffered else 2
    est = 0
    est += 2 * sub(S) * lane(H) * x_bytes                                 # x row (double-buffered)
    est += 2 * 8 * lane(S) * 4                                            # mask block
    est += 2 * sub(q_tile) * lane(H) * x_bytes                            # output tile (double-buffered)
    est += wbuf * (sub(H) + sub(2 * H) + sub(H)) * lane(H) * 2            # wq, wkv, wo (bf16)
    est += wbuf * ((sub(H) + sub(2 * H)) * lane(1) + 3 * 8 * lane(H)) * 4  # biases / LN params
    est += 2 * NH * sub(d) * lane(S) * 2                                  # K^T / V^T scratch (bf16)
    est += (sub(H) + sub(2 * H)) * lane(S) * 4                            # xT / kvT staging temporaries
    est += 2 * NH * sub(q_tile) * lane(S) * 4                             # scores + probs (f32)
    est += 4 * sub(q_tile) * lane(H) * 4                                  # q/ctx/y tile temporaries
    est = int(est * 1.5)                                                  # compiler-scratch headroom
    cap = int(_vmem_capacity_bytes() * 0.75)                              # never the full physical VMEM
    return max(min(est, cap), 32 * 1024 * 1024)


def _build_call(B, S, H, num_heads, head_dim, q_tile, out_dtype, eps,
                single_buffer_weights, vmem_limit_bytes):
    n_q = S // q_tile
    const_kwargs = dict(pipeline_mode=pl.Buffered(1)) if single_buffer_weights else {}

    def const_spec(shape):
        # Constant operands: block index never changes -> single-buffer when supported.
        return pl.BlockSpec(shape, lambda b, t: (0,) * len(shape), **const_kwargs)

    kernel = functools.partial(bert_attention_kernel, num_heads=num_heads,
                               head_dim=head_dim, q_tile=q_tile, eps=eps)

    # TODO(synk): on v7x with B == 1, add a leading "parallel" head-group grid axis
    # so both TensorCores are used for single-sequence inference.
    return pl.pallas_call(
        kernel,
        out_shape=jax.ShapeDtypeStruct((B, S, H), out_dtype),
        grid_spec=pltpu.PrefetchScalarGridSpec(
            num_scalar_prefetch=0,
            grid=(B, n_q),
            in_specs=[
                pl.BlockSpec((1, S, H), lambda b, t: (b, 0, 0)),          # hidden_states row
                pl.BlockSpec((1, 1, S), lambda b, t: (b, 0, 0)),          # additive mask
                const_spec((H, H)),                                       # W_q (scaled, bf16)
                const_spec((H, 1)),                                       # b_q (scaled, f32)
                const_spec((2 * H, H)),                                   # fused W_kv (bf16)
                const_spec((2 * H, 1)),                                   # fused b_kv (f32)
                const_spec((H, H)),                                       # W_o^T (bf16)
                const_spec((1, H)),                                       # b_o
                const_spec((1, H)),                                       # LayerNorm gamma
                const_spec((1, H)),                                       # LayerNorm beta
            ],
            out_specs=pl.BlockSpec((1, q_tile, H), lambda b, t: (b, t, 0)),
            scratch_shapes=[
                pltpu.VMEM((num_heads, head_dim, S), jnp.bfloat16),       # K^T (lane-dense)
                pltpu.VMEM((num_heads, head_dim, S), jnp.bfloat16),       # V^T (lane-dense)
            ],
        ),
        compiler_params=pltpu.CompilerParams(
            dimension_semantics=("parallel", "arbitrary"),
            vmem_limit_bytes=vmem_limit_bytes,
        ),
    )


def bert_attention(hidden_states, attention_mask, prepped, *, num_heads,
                   eps=1e-12, max_q_tile=None):
    """BertAttention forward.  hidden_states may be f32 or bf16 (bf16 halves the
    input/output DMA traffic; all matmuls already run in bf16 internally)."""
    B, S, H = hidden_states.shape
    assert H % num_heads == 0
    head_dim = H // num_heads

    if attention_mask is None:
        mask = jnp.zeros((B, 1, S), jnp.float32)
    else:
        # Only the HF additive *padding* mask (B, 1, 1, S) is supported; extended
        # (B, 1, S, S) decoder/causal masks would be silently mis-read otherwise.
        assert attention_mask.shape == (B, 1, 1, S), (
            f"expected additive padding mask of shape {(B, 1, 1, S)}, got "
            f"{attention_mask.shape}")
        mask = attention_mask.reshape(B, 1, S).astype(jnp.float32)

    if max_q_tile is None:
        # v5e/v6e (128 MiB VMEM): larger query tiles amortize per-step overhead.
        # v7x (64 MiB/TC): keep 128 so f32 score/prob temporaries stay in budget.
        max_q_tile = 256 if _vmem_capacity_bytes() >= 100 * 1024 * 1024 else 128
    q_tile = _pick_q_tile(S, max_q_tile)

    single_buf = _single_buffered_constants_supported()
    vmem_limit = _estimate_vmem_limit_bytes(
        S, H, num_heads, head_dim, q_tile,
        jnp.dtype(hidden_states.dtype).itemsize, single_buf)

    call = _build_call(B, S, H, num_heads, head_dim, q_tile,
                       hidden_states.dtype, eps, single_buf, vmem_limit)
    return call(hidden_states, mask, prepped["w_q"], prepped["b_q"],
                prepped["w_kv"], prepped["b_kv"], prepped["w_o"],
                prepped["b_o"], prepped["gamma"], prepped["beta"])


# --------------------------------------------------------------------------- #
# Pure-JAX reference (eval-mode PyTorch forward)
# --------------------------------------------------------------------------- #
def reference_bert_attention(x, mask, params, *, num_heads, eps=1e-12):
    B, S, H = x.shape
    d = H // num_heads
    xf = x.astype(jnp.float32)

    def lin(inp, w, b):
        return inp @ w.T + b

    q = lin(xf, params["wq"], params["bq"]).reshape(B, S, num_heads, d).transpose(0, 2, 1, 3)
    k = lin(xf, params["wk"], params["bk"]).reshape(B, S, num_heads, d).transpose(0, 2, 1, 3)
    v = lin(xf, params["wv"], params["bv"]).reshape(B, S, num_heads, d).transpose(0, 2, 1, 3)

    scores = jnp.einsum("bhqd,bhkd->bhqk", q, k) / math.sqrt(d)
    scores = scores + mask  # (B,1,1,S) broadcasts
    probs = jax.nn.softmax(scores, axis=-1)
    ctx = jnp.einsum("bhqk,bhkd->bhqd", probs, v).transpose(0, 2, 1, 3).reshape(B, S, H)

    y = lin(ctx, params["wo"], params["bo"]) + xf
    mean = jnp.mean(y, axis=-1, keepdims=True)
    var = jnp.mean(jnp.square(y - mean), axis=-1, keepdims=True)
    return ((y - mean) * jax.lax.rsqrt(var + eps) * params["gamma"]
            + params["beta"]).astype(x.dtype)


# --------------------------------------------------------------------------- #
# Demo / self-check
# --------------------------------------------------------------------------- #
if __name__ == "__main__":
    # Small BERT-like config: batch=2, seq=8, hidden=32, heads=4 (head_dim=8).
    B, S, H, NH = 2, 8, 32, 4

    key = jax.random.PRNGKey(0)
    keys = jax.random.split(key, 10)

    params = {
        "wq": 0.02 * jax.random.normal(keys[0], (H, H), jnp.float32),
        "bq": 0.02 * jax.random.normal(keys[1], (H,), jnp.float32),
        "wk": 0.02 * jax.random.normal(keys[2], (H, H), jnp.float32),
        "bk": 0.02 * jax.random.normal(keys[3], (H,), jnp.float32),
        "wv": 0.02 * jax.random.normal(keys[4], (H, H), jnp.float32),
        "bv": 0.02 * jax.random.normal(keys[5], (H,), jnp.float32),
        "wo": 0.02 * jax.random.normal(keys[6], (H, H), jnp.float32),
        "bo": 0.02 * jax.random.normal(keys[7], (H,), jnp.float32),
        "gamma": jnp.ones((H,), jnp.float32),
        "beta": jnp.zeros((H,), jnp.float32),
    }

    hidden_states = jax.random.normal(keys[8], (B, S, H), jnp.float32)

    # HF-style additive attention mask: 0 = attend, -10000 = padded.
    pad = jnp.array([[0] * S, [0] * (S - 2) + [1, 1]], jnp.float32)  # batch 1: 2 pad tokens
    attention_mask = (pad * -10000.0).reshape(B, 1, 1, S)

    # Weight prep (QKV scale-fold / fusion / bf16 cast) hoisted out of the call path.
    prepped = prepare_bert_attention_params(params, num_heads=NH)

    out = bert_attention(hidden_states, attention_mask, prepped, num_heads=NH)
    out = jax.block_until_ready(out)

    ref = reference_bert_attention(hidden_states, attention_mask, params, num_heads=NH)
    assert out.shape == (B, S, H)
    # bf16 MXU inputs with f32 accumulation -> compare at bf16-level tolerance.
    assert jnp.allclose(out, ref, atol=2e-2, rtol=2e-2), "mismatch vs reference"

    print("KERNEL_OK")
</pallas_src>

<mosaic_0001>
module attributes {stable_mosaic.version = 11 : i64} {
  func.func @_copy(%arg0: i32, %arg1: memref<8x128xf32, #tpu.memory_space<vmem>>, %arg2: memref<8x128xf32, #tpu.memory_space<vmem>>) attributes {dimension_semantics = [#tpu.dimension_semantics<arbitrary>], iteration_bounds = array<i64: 1>, scalar_prefetch = 0 : i64, scratch_operands = 0 : i64, tpu.core_type = #tpu.core_type<tc>, window_params = [{pipeline_mode = #tpu.pipeline_mode<synchronous>, transform_indices = @transform_0, window_bounds = array<i64: 8, 128>}, {pipeline_mode = #tpu.pipeline_mode<synchronous>, transform_indices = @transform_1, window_bounds = array<i64: 8, 128>}]} {
    %c0 = arith.constant 0 : index
    %c0_0 = arith.constant 0 : index
    %0 = vector.load %arg1[%c0, %c0_0] : memref<8x128xf32, #tpu.memory_space<vmem>>, vector<8x128xf32>
    %c0_1 = arith.constant 0 : index
    %c0_2 = arith.constant 0 : index
    %1 = vector.load %arg2[%c0_1, %c0_2] : memref<8x128xf32, #tpu.memory_space<vmem>>, vector<8x128xf32>
    tpu.vector_store %arg2[%c0_1, %c0_2], %0 {strides = array<i32>} : memref<8x128xf32, #tpu.memory_space<vmem>>, vector<8x128xf32>,
    return
  }
  func.func @transform_0(%arg0: i32) -> (i32, i32) {
    %c0_i32 = arith.constant 0 : i32
    %c0_i32_0 = arith.constant 0 : i32
    %c0_i32_1 = arith.constant 0 : i32
    return %c0_i32, %c0_i32_0 : i32, i32
  }
  func.func @transform_1(%arg0: i32) -> (i32, i32) {
    %c0_i32 = arith.constant 0 : i32
    %c0_i32_0 = arith.constant 0 : i32
    %c0_i32_1 = arith.constant 0 : i32
    return %c0_i32, %c0_i32_0 : i32, i32
  }
}

module attributes {stable_mosaic.version = 11 : i64} {
  func.func @bert_attention_kernel(%arg0: i32, %arg1: i32, %arg2: memref<1x8x32xf32, #tpu.memory_space<vmem>>, %arg3: memref<1x1x8xf32, #tpu.memory_space<vmem>>, %arg4: memref<32x32xbf16, #tpu.memory_space<vmem>>, %arg5: memref<32x1xf32, #tpu.memory_space<vmem>>, %arg6: memref<64x32xbf16, #tpu.memory_space<vmem>>, %arg7: memref<64x1xf32, #tpu.memory_space<vmem>>, %arg8: memref<32x32xbf16, #tpu.memory_space<vmem>>, %arg9: memref<1x32xf32, #tpu.memory_space<vmem>>, %arg10: memref<1x32xf32, #tpu.memory_space<vmem>>, %arg11: memref<1x32xf32, #tpu.memory_space<vmem>>, %arg12: memref<1x8x32xf32, #tpu.memory_space<vmem>>, %arg13: memref<4x8x8xbf16, #tpu.memory_space<vmem>>, %arg14: memref<4x8x8xbf16, #tpu.memory_space<vmem>>) attributes {dimension_semantics = [#tpu.dimension_semantics<parallel>, #tpu.dimension_semantics<arbitrary>], iteration_bounds = array<i64: 2, 1>, scalar_prefetch = 0 : i64, scratch_operands = 2 : i64, tpu.core_type = #tpu.core_type<tc>, window_params = [{transform_indices = @transform_0, window_bounds = array<i64: 1, 8, 32>}, {transform_indices = @transform_1, window_bounds = array<i64: 1, 1, 8>}, {pipeline_mode = #tpu.pipeline_mode<synchronous>, transform_indices = @transform_2, window_bounds = array<i64: 32, 32>}, {pipeline_mode = #tpu.pipeline_mode<synchronous>, transform_indices = @transform_3, window_bounds = array<i64: 32, 1>}, {pipeline_mode = #tpu.pipeline_mode<synchronous>, transform_indices = @transform_4, window_bounds = array<i64: 64, 32>}, {pipeline_mode = #tpu.pipeline_mode<synchronous>, transform_indices = @transform_5, window_bounds = array<i64: 64, 1>}, {pipeline_mode = #tpu.pipeline_mode<synchronous>, transform_indices = @transform_6, window_bounds = array<i64: 32, 32>}, {pipeline_mode = #tpu.pipeline_mode<synchronous>, transform_indices = @transform_7, window_bounds = array<i64: 1, 32>}, {pipeline_mode = #tpu.pipeline_mode<synchronous>, transform_indices = @transform_8, window_bounds = array<i64: 1, 32>}, {pipeline_mode = #tpu.pipeline_mode<synchronous>, transform_indices = @transform_9, window_bounds = array<i64: 1, 32>}, {transform_indices = @transform_10, window_bounds = array<i64: 1, 8, 32>}]} {
    %c0_i32 = arith.constant 0 : i32
    %0 = arith.cmpi eq, %arg1, %c0_i32 : i32
    %1 = arith.extui %0 : i1 to i32
    %c0_i32_0 = arith.constant 0 : i32
    %2 = arith.cmpi ne, %1, %c0_i32_0 : i32
    scf.if %2 {
      %c0_36 = arith.constant 0 : index
      %c0_37 = arith.constant 0 : index
      %c0_38 = arith.constant 0 : index
      %81 = vector.load %arg2[%c0_36, %c0_37, %c0_38] : memref<1x8x32xf32, #tpu.memory_space<vmem>>, vector<1x8x32xf32>
      %82 = vector.shape_cast %81 : vector<1x8x32xf32> to vector<8x32xf32>
      %83 = tpu.transpose %82, [1, 0] : vector<8x32xf32> -> vector<32x8xf32>
      %84 = arith.truncf %83 : vector<32x8xf32> to vector<32x8xbf16>
      %c0_39 = arith.constant 0 : index
      %c0_40 = arith.constant 0 : index
      %85 = vector.load %arg6[%c0_39, %c0_40] : memref<64x32xbf16, #tpu.memory_space<vmem>>, vector<64x32xbf16>
      %cst_41 = arith.constant dense<0.000000e+00> : vector<64x8xf32>
      %86 = tpu.matmul %85, %84, %cst_41 {dimension_numbers = #tpu.dot_dimension_numbers<[1], [0], [0], [1], [0, 0, 1, 1], [], []>} : vector<64x32xbf16>, vector<32x8xbf16>, vector<64x8xf32> -> vector<64x8xf32>
      %c0_42 = arith.constant 0 : index
      %c0_43 = arith.constant 0 : index
      %87 = vector.load %arg7[%c0_42, %c0_43] : memref<64x1xf32, #tpu.memory_space<vmem>>, vector<64x1xf32>
      %88 = vector.broadcast %87 : vector<64x1xf32> to vector<64x8xf32>
      %89 = arith.addf %86, %88 : vector<64x8xf32>
      %90 = vector.extract_strided_slice %89 {offsets = [0, 0], sizes = [32, 8], strides = [1, 1]} : vector<64x8xf32> to vector<32x8xf32>
      %91 = vector.shape_cast %90 : vector<32x8xf32> to vector<4x8x8xf32>
      %92 = arith.truncf %91 : vector<4x8x8xf32> to vector<4x8x8xbf16>
      %c0_44 = arith.constant 0 : index
      %c0_45 = arith.constant 0 : index
      %c0_46 = arith.constant 0 : index
      %93 = vector.load %arg13[%c0_44, %c0_45, %c0_46] : memref<4x8x8xbf16, #tpu.memory_space<vmem>>, vector<4x8x8xbf16>
      tpu.vector_store %arg13[%c0_44, %c0_45, %c0_46], %92 {strides = array<i32>} : memref<4x8x8xbf16, #tpu.memory_space<vmem>>, vector<4x8x8xbf16>,
      %94 = vector.extract_strided_slice %89 {offsets = [32, 0], sizes = [32, 8], strides = [1, 1]} : vector<64x8xf32> to vector<32x8xf32>
      %95 = vector.shape_cast %94 : vector<32x8xf32> to vector<4x8x8xf32>
      %96 = arith.truncf %95 : vector<4x8x8xf32> to vector<4x8x8xbf16>
      %c0_47 = arith.constant 0 : index
      %c0_48 = arith.constant 0 : index
      %c0_49 = arith.constant 0 : index
      %97 = vector.load %arg14[%c0_47, %c0_48, %c0_49] : memref<4x8x8xbf16, #tpu.memory_space<vmem>>, vector<4x8x8xbf16>
      tpu.vector_store %arg14[%c0_47, %c0_48, %c0_49], %96 {strides = array<i32>} : memref<4x8x8xbf16, #tpu.memory_space<vmem>>, vector<4x8x8xbf16>,
    } else {
    }
    %c8_i32 = arith.constant 8 : i32
    %3 = arith.muli %arg1, %c8_i32 : i32
    %4 = tpu.assume_multiple %3, 8 : i32
    %c0 = arith.constant 0 : index
    %5 = arith.index_cast %4 : i32 to index
    %c0_1 = arith.constant 0 : index
    %6 = vector.load %arg2[%c0, %5, %c0_1] : memref<1x8x32xf32, #tpu.memory_space<vmem>>, vector<1x8x32xf32>
    %7 = vector.shape_cast %6 : vector<1x8x32xf32> to vector<8x32xf32>
    %8 = tpu.transpose %7, [1, 0] : vector<8x32xf32> -> vector<32x8xf32>
    %9 = arith.truncf %8 : vector<32x8xf32> to vector<32x8xbf16>
    %c0_2 = arith.constant 0 : index
    %c0_3 = arith.constant 0 : index
    %10 = vector.load %arg4[%c0_2, %c0_3] : memref<32x32xbf16, #tpu.memory_space<vmem>>, vector<32x32xbf16>
    %cst = arith.constant dense<0.000000e+00> : vector<32x8xf32>
    %11 = tpu.matmul %10, %9, %cst {dimension_numbers = #tpu.dot_dimension_numbers<[1], [0], [0], [1], [0, 0, 1, 1], [], []>} : vector<32x32xbf16>, vector<32x8xbf16>, vector<32x8xf32> -> vector<32x8xf32>
    %c0_4 = arith.constant 0 : index
    %c0_5 = arith.constant 0 : index
    %12 = vector.load %arg5[%c0_4, %c0_5] : memref<32x1xf32, #tpu.memory_space<vmem>>, vector<32x1xf32>
    %13 = vector.broadcast %12 : vector<32x1xf32> to vector<32x8xf32>
    %14 = arith.addf %11, %13 : vector<32x8xf32>
    %15 = vector.shape_cast %14 : vector<32x8xf32> to vector<4x8x8xf32>
    %16 = tpu.transpose %15, [0, 2, 1] : vector<4x8x8xf32> -> vector<4x8x8xf32>
    %17 = arith.truncf %16 : vector<4x8x8xf32> to vector<4x8x8xbf16>
    %c0_6 = arith.constant 0 : index
    %c0_7 = arith.constant 0 : index
    %c0_8 = arith.constant 0 : index
    %18 = vector.load %arg3[%c0_6, %c0_7, %c0_8] : memref<1x1x8xf32, #tpu.memory_space<vmem>>, vector<1x1x8xf32>
    %19 = vector.shape_cast %18 : vector<1x1x8xf32> to vector<8xf32>
    %c0_9 = arith.constant 0 : index
    %c0_10 = arith.constant 0 : index
    %c0_11 = arith.constant 0 : index
    %20 = vector.load %arg13[%c0_9, %c0_10, %c0_11] : memref<4x8x8xbf16, #tpu.memory_space<vmem>>, vector<4x8x8xbf16>
    "tpu.trace_start"() <{level = 10 : i32, message = "hqd,hdk->hqk"}> : () -> ()
    %cst_12 = arith.constant dense<0.000000e+00> : vector<4x8x8xf32>
    %21 = tpu.matmul %17, %20, %cst_12 {dimension_numbers = #tpu.dot_dimension_numbers<[2], [1], [1], [2], [0, 0, 0, 1, 1, 2], [0], [0]>} : vector<4x8x8xbf16>, vector<4x8x8xbf16>, vector<4x8x8xf32> -> vector<4x8x8xf32>
    "tpu.trace_stop"() : () -> ()
    %22 = vector.shape_cast %19 : vector<8xf32> to vector<1x1x8xf32>
    %23 = vector.broadcast %22 : vector<1x1x8xf32> to vector<4x8x8xf32>
    %24 = arith.addf %21, %23 : vector<4x8x8xf32>
    %cst_13 = arith.constant dense<0xFF800000> : vector<4x8xf32>
    %25 = vector.multi_reduction <maximumf>, %24, %cst_13 [2] : vector<4x8x8xf32> to vector<4x8xf32>
    %26 = vector.shape_cast %25 : vector<4x8xf32> to vector<4x8x1xf32>
    %27 = vector.broadcast %26 : vector<4x8x1xf32> to vector<4x8x8xf32>
    %28 = arith.subf %24, %27 : vector<4x8x8xf32>
    %29 = math.exp %28 : vector<4x8x8xf32>
    %cst_14 = arith.constant dense<0.000000e+00> : vector<4x8xf32>
    %30 = vector.multi_reduction <add>, %29, %cst_14 [2] : vector<4x8x8xf32> to vector<4x8xf32>
    %31 = vector.shape_cast %30 : vector<4x8xf32> to vector<4x8x1xf32>
    %32 = tpu.reciprocal %31 {approx = true} : vector<4x8x1xf32> -> vector<4x8x1xf32>
    %33 = vector.broadcast %32 : vector<4x8x1xf32> to vector<4x8x8xf32>
    %34 = arith.mulf %29, %33 : vector<4x8x8xf32>
    %35 = arith.truncf %34 : vector<4x8x8xf32> to vector<4x8x8xbf16>
    %c0_15 = arith.constant 0 : index
    %c0_16 = arith.constant 0 : index
    %c0_17 = arith.constant 0 : index
    %36 = vector.load %arg14[%c0_15, %c0_16, %c0_17] : memref<4x8x8xbf16, #tpu.memory_space<vmem>>, vector<4x8x8xbf16>
    "tpu.trace_start"() <{level = 10 : i32, message = "hqk,hdk->hqd"}> : () -> ()
    %cst_18 = arith.constant dense<0.000000e+00> : vector<4x8x8xf32>
    %37 = tpu.matmul %35, %36, %cst_18 {dimension_numbers = #tpu.dot_dimension_numbers<[2], [2], [1], [1], [0, 0, 0, 1, 1, 1], [0], [0]>} : vector<4x8x8xbf16>, vector<4x8x8xbf16>, vector<4x8x8xf32> -> vector<4x8x8xf32>
    "tpu.trace_stop"() : () -> ()
    %38 = tpu.transpose %37, [0, 2, 1] : vector<4x8x8xf32> -> vector<4x8x8xf32>
    %39 = vector.shape_cast %38 : vector<4x8x8xf32> to vector<32x8xf32>
    %40 = tpu.transpose %39, [1, 0] : vector<32x8xf32> -> vector<8x32xf32>
    %41 = arith.truncf %40 : vector<8x32xf32> to vector<8x32xbf16>
    %c0_19 = arith.constant 0 : index
    %c0_20 = arith.constant 0 : index
    %42 = vector.load %arg9[%c0_19, %c0_20] : memref<1x32xf32, #tpu.memory_space<vmem>>, vector<1x32xf32>
    %43 = vector.shape_cast %42 : vector<1x32xf32> to vector<32xf32>
    %44 = vector.shape_cast %43 : vector<32xf32> to vector<1x32xf32>
    %45 = vector.broadcast %44 : vector<1x32xf32> to vector<8x32xf32>
    %46 = arith.addf %7, %45 : vector<8x32xf32>
    %c0_21 = arith.constant 0 : index
    %c0_22 = arith.constant 0 : index
    %47 = vector.load %arg8[%c0_21, %c0_22] : memref<32x32xbf16, #tpu.memory_space<vmem>>, vector<32x32xbf16>
    %cst_23 = arith.constant dense<0.000000e+00> : vector<8x32xf32>
    %48 = tpu.matmul %41, %47, %cst_23 {dimension_numbers = #tpu.dot_dimension_numbers<[1], [0], [0], [1], [0, 0, 1, 1], [], []>} : vector<8x32xbf16>, vector<32x32xbf16>, vector<8x32xf32> -> vector<8x32xf32>
    %49 = arith.addf %46, %48 : vector<8x32xf32>
    %cst_24 = arith.constant dense<0.000000e+00> : vector<8xf32>
    %50 = vector.multi_reduction <add>, %49, %cst_24 [1] : vector<8x32xf32> to vector<8xf32>
    %51 = vector.shape_cast %50 : vector<8xf32> to vector<8x1xf32>
    %cst_25 = arith.constant 3.200000e+01 : f32
    %52 = vector.broadcast %cst_25 : f32 to vector<8x1xf32>
    %53 = arith.divf %51, %52 : vector<8x1xf32>
    %54 = vector.broadcast %53 : vector<8x1xf32> to vector<8x32xf32>
    %55 = arith.subf %49, %54 : vector<8x32xf32>
    %56 = arith.mulf %55, %55 : vector<8x32xf32>
    %cst_26 = arith.constant dense<0.000000e+00> : vector<8xf32>
    %57 = vector.multi_reduction <add>, %56, %cst_26 [1] : vector<8x32xf32> to vector<8xf32>
    %58 = vector.shape_cast %57 : vector<8xf32> to vector<8x1xf32>
    %cst_27 = arith.constant 3.200000e+01 : f32
    %59 = vector.broadcast %cst_27 : f32 to vector<8x1xf32>
    %60 = arith.divf %58, %59 : vector<8x1xf32>
    %61 = vector.broadcast %53 : vector<8x1xf32> to vector<8x32xf32>
    %62 = arith.subf %49, %61 : vector<8x32xf32>
    %cst_28 = arith.constant 9.99999996E-13 : f32
    %63 = vector.broadcast %cst_28 : f32 to vector<8x1xf32>
    %64 = arith.addf %60, %63 : vector<8x1xf32>
    %65 = math.rsqrt %64 : vector<8x1xf32>
    %66 = vector.broadcast %65 : vector<8x1xf32> to vector<8x32xf32>
    %67 = arith.mulf %62, %66 : vector<8x32xf32>
    %c0_29 = arith.constant 0 : index
    %c0_30 = arith.constant 0 : index
    %68 = vector.load %arg10[%c0_29, %c0_30] : memref<1x32xf32, #tpu.memory_space<vmem>>, vector<1x32xf32>
    %69 = vector.shape_cast %68 : vector<1x32xf32> to vector<32xf32>
    %70 = vector.shape_cast %69 : vector<32xf32> to vector<1x32xf32>
    %71 = vector.broadcast %70 : vector<1x32xf32> to vector<8x32xf32>
    %72 = arith.mulf %67, %71 : vector<8x32xf32>
    %c0_31 = arith.constant 0 : index
    %c0_32 = arith.constant 0 : index
    %73 = vector.load %arg11[%c0_31, %c0_32] : memref<1x32xf32, #tpu.memory_space<vmem>>, vector<1x32xf32>
    %74 = vector.shape_cast %73 : vector<1x32xf32> to vector<32xf32>
    %75 = vector.shape_cast %74 : vector<32xf32> to vector<1x32xf32>
    %76 = vector.broadcast %75 : vector<1x32xf32> to vector<8x32xf32>
    %77 = arith.addf %72, %76 : vector<8x32xf32>
    %c0_33 = arith.constant 0 : index
    %c0_34 = arith.constant 0 : index
    %c0_35 = arith.constant 0 : index
    %78 = vector.load %arg12[%c0_33, %c0_34, %c0_35] : memref<1x8x32xf32, #tpu.memory_space<vmem>>, vector<1x8x32xf32>
    %79 = vector.shape_cast %78 : vector<1x8x32xf32> to vector<8x32xf32>
    %80 = vector.shape_cast %77 : vector<8x32xf32> to vector<1x8x32xf32>
    tpu.vector_store %arg12[%c0_33, %c0_34, %c0_35], %80 {strides = array<i32>} : memref<1x8x32xf32, #tpu.memory_space<vmem>>, vector<1x8x32xf32>,
    return
  }
  func.func @transform_0(%arg0: i32, %arg1: i32) -> (i32, i32, i32) {
    %c0_i32 = arith.constant 0 : i32
    %c0_i32_0 = arith.constant 0 : i32
    %c0_i32_1 = arith.constant 0 : i32
    return %arg0, %c0_i32, %c0_i32_0 : i32, i32, i32
  }
  func.func @transform_1(%arg0: i32, %arg1: i32) -> (i32, i32, i32) {
    %c0_i32 = arith.constant 0 : i32
    %c0_i32_0 = arith.constant 0 : i32
    %c0_i32_1 = arith.constant 0 : i32
    return %arg0, %c0_i32, %c0_i32_0 : i32, i32, i32
  }
  func.func @transform_2(%arg0: i32, %arg1: i32) -> (i32, i32) {
    %c0_i32 = arith.constant 0 : i32
    %c0_i32_0 = arith.constant 0 : i32
    %c0_i32_1 = arith.constant 0 : i32
    return %c0_i32, %c0_i32_0 : i32, i32
  }
  func.func @transform_3(%arg0: i32, %arg1: i32) -> (i32, i32) {
    %c0_i32 = arith.constant 0 : i32
    %c0_i32_0 = arith.constant 0 : i32
    %c0_i32_1 = arith.constant 0 : i32
    return %c0_i32, %c0_i32_0 : i32, i32
  }
  func.func @transform_4(%arg0: i32, %arg1: i32) -> (i32, i32) {
    %c0_i32 = arith.constant 0 : i32
    %c0_i32_0 = arith.constant 0 : i32
    %c0_i32_1 = arith.constant 0 : i32
    return %c0_i32, %c0_i32_0 : i32, i32
  }
  func.func @transform_5(%arg0: i32, %arg1: i32) -> (i32, i32) {
    %c0_i32 = arith.constant 0 : i32
    %c0_i32_0 = arith.constant 0 : i32
    %c0_i32_1 = arith.constant 0 : i32
    return %c0_i32, %c0_i32_0 : i32, i32
  }
  func.func @transform_6(%arg0: i32, %arg1: i32) -> (i32, i32) {
    %c0_i32 = arith.constant 0 : i32
    %c0_i32_0 = arith.constant 0 : i32
    %c0_i32_1 = arith.constant 0 : i32
    return %c0_i32, %c0_i32_0 : i32, i32
  }
  func.func @transform_7(%arg0: i32, %arg1: i32) -> (i32, i32) {
    %c0_i32 = arith.constant 0 : i32
    %c0_i32_0 = arith.constant 0 : i32
    %c0_i32_1 = arith.constant 0 : i32
    return %c0_i32, %c0_i32_0 : i32, i32
  }
  func.func @transform_8(%arg0: i32, %arg1: i32) -> (i32, i32) {
    %c0_i32 = arith.constant 0 : i32
    %c0_i32_0 = arith.constant 0 : i32
    %c0_i32_1 = arith.constant 0 : i32
    return %c0_i32, %c0_i32_0 : i32, i32
  }
  func.func @transform_9(%arg0: i32, %arg1: i32) -> (i32, i32) {
    %c0_i32 = arith.constant 0 : i32
    %c0_i32_0 = arith.constant 0 : i32
    %c0_i32_1 = arith.constant 0 : i32
    return %c0_i32, %c0_i32_0 : i32, i32
  }
  func.func @transform_10(%arg0: i32, %arg1: i32) -> (i32, i32, i32) {
    %c0_i32 = arith.constant 0 : i32
    %c0_i32_0 = arith.constant 0 : i32
    return %arg0, %arg1, %c0_i32 : i32, i32, i32
  }
}

</mosaic_0001>

<llo_original>
// kernel: tpu_custom_call.1
$region0: #{tpu_custom_call.1}
  #allocation0 [shape = 'u32[]', space=smem, size = 0x4, offset = 0x4, fixed_abs, tag = 'smem constant byte address 0x4 - core index']
  #allocation1 [shape = 'u32[72,128]{1,0:T(1,128)}', space=vmem, size = 0x9000, scoped, tag = 'internal scratch']
  %s0 = inlined_call_operand.hbm [shape: f32[8,128], index: 0, kind: input, shape index: {}]
  %s1 = inlined_call_operand.hbm [shape: f32[8,128], index: 1, kind: output, shape index: {}]
  %s2 = sld [smem:[#allocation0]]
  $region18: #{tpu_custom_call.1} parent=0
    _
  %s4 = ssub.s32 1, %s2
  %s5 = scalar_select 0, %s4, %s2
  $region1: #{tpu_custom_call.1} parent=0
    #allocation2 [shape = 'u8[4096]{0}', space=vmem, size = 0x1000, scoped, tag = 'input window, operand 0, single buffered']
    #allocation3 [shape = 's32[1]{0}', space=sflag, size = 0x4, scoped, tag = 'scoped memory for tpu_custom_call.1']
    #allocation4 [shape = 's32[1]{0}', space=sflag, size = 0x4, scoped, tag = 'scoped memory for tpu_custom_call.1']
    #allocation5 [shape = 'u8[4096]{0}', space=vmem, size = 0x1000, scoped, tag = 'output window, operand 0, single buffered']
    %6 = vsyncpa [#allocation3], 0
    %7 = vsyncpa [#allocation4], 0
    // Predicated region
    $region2: #{tpu_custom_call.1} parent=1 // pred_check
      _
    $region3: #{tpu_custom_call.1} parent=1 // pred_check_branch
      %9 = sbr.rel (0) target = $region5
    $region4: #{tpu_custom_call.1} parent=1 // pred_region
      %11 = vsyncadd [#allocation3], 0
      %s13 = sshll.u32 %s0, 4
      %s14 = int_to_ptr.hbm [resolvable:$true] %s13
      %s15 = sshll.u32 [#allocation2], 4
      %s16 = int_to_ptr.vmem [resolvable:$true] %s15
      %18 = dma.hbm_to_vmem [thread:$0]  %s14, 128, %s16, [#allocation3]
    $region5: #{tpu_custom_call.1} parent=1 // pred_fallthru
      _
    // Predicated region
    $region6: #{tpu_custom_call.1} parent=1 // pred_check
      _
    $region7: #{tpu_custom_call.1} parent=1 // pred_check_branch
      %20 = sbr.rel (0) target = $region9
    $region8: #{tpu_custom_call.1} parent=1 // pred_region
      %22 = dma.done [#allocation3], 128
    $region9: #{tpu_custom_call.1} parent=1 // pred_fallthru
      _
    %v23 = vld [vmem:[#allocation2] sm:$0xff]
    %24 = vst [vmem:[#allocation5] sm:$0xff] %v23
    // Predicated region
    $region10: #{tpu_custom_call.1} parent=1 // pred_check
      _
    $region11: #{tpu_custom_call.1} parent=1 // pred_check_branch
      %26 = sbr.rel (0) target = $region13
    $region12: #{tpu_custom_call.1} parent=1 // pred_region
      %28 = vsyncadd [#allocation4], 0
      %s30 = sshll.u32 [#allocation5], 4
      %s31 = int_to_ptr.vmem [resolvable:$true] %s30
      %s32 = sshll.u32 %s1, 4
      %s33 = int_to_ptr.hbm [resolvable:$true] %s32
      %35 = dma.vmem_to_hbm [thread:$0]  %s31, 128, %s33, [#allocation4]
    $region13: #{tpu_custom_call.1} parent=1 // pred_fallthru
      _
    // Predicated region
    $region14: #{tpu_custom_call.1} parent=1 // pred_check
      _
    $region15: #{tpu_custom_call.1} parent=1 // pred_check_branch
      %37 = sbr.rel (0) target = $region17
    $region16: #{tpu_custom_call.1} parent=1 // pred_region
      %39 = dma.done [#allocation4], 128
    $region17: #{tpu_custom_call.1} parent=1 // pred_fallthru
      _
    %40 = vsyncpa [#allocation3], 1
    %41 = vsyncpa [#allocation4], 1

// kernel: tpu_custom_call.1
$region0: #{tpu_custom_call.1}
  #allocation0 [shape = 'u32[]', space=smem, size = 0x4, offset = 0x4, fixed_abs, tag = 'smem constant byte address 0x4 - core index']
  #allocation1 [shape = 'u32[72,128]{1,0:T(1,128)}', space=vmem, size = 0x9000, scoped, tag = 'internal scratch']
  #allocation2 [shape = 'bf16[4,8,8]{2,1,0:T(8,128)(2,1)}', space=vmem, size = 0x2000, scoped, tag = 'scratch operand']
  #allocation3 [shape = 'bf16[4,8,8]{2,1,0:T(8,128)(2,1)}', space=vmem, size = 0x2000, scoped, tag = 'scratch operand']
  %s0 = inlined_call_operand.vmem [shape: f32[2,8,32], index: 0, kind: input, shape index: {}]
  %s1 = inlined_call_operand.vmem [shape: f32[2,1,8], index: 1, kind: input, shape index: {}]
  %s2 = inlined_call_operand.vmem [shape: bf16[32,32], index: 2, kind: input, shape index: {}]
  %s3 = inlined_call_operand.vmem [shape: f32[32,1], index: 3, kind: input, shape index: {}]
  %s4 = inlined_call_operand.vmem [shape: bf16[64,32], index: 4, kind: input, shape index: {}]
  %s5 = inlined_call_operand.vmem [shape: f32[64,1], index: 5, kind: input, shape index: {}]
  %s6 = inlined_call_operand.vmem [shape: bf16[32,32], index: 6, kind: input, shape index: {}]
  %s7 = inlined_call_operand.vmem [shape: f32[1,32], index: 7, kind: input, shape index: {}]
  %s8 = inlined_call_operand.vmem [shape: f32[1,32], index: 8, kind: input, shape index: {}]
  %s9 = inlined_call_operand.vmem [shape: f32[1,32], index: 9, kind: input, shape index: {}]
  %s10 = inlined_call_operand.hbm [shape: f32[2,8,32], index: 10, kind: output, shape index: {}]
  %s11 = sld [smem:[#allocation0]]
  $region77: #{tpu_custom_call.1} parent=0
    _
  %s13 = ssub.s32 1, %s11
  %s14 = scalar_select 0, %s13, %s11
  $region1: #{tpu_custom_call.1} parent=0
    #allocation4 [shape = 'u8[8192]{0}', space=vmem, size = 0x2000, scoped, tag = 'output window, operand 0']
    #allocation5 [shape = 's32[2]{0}', space=sflag, size = 0x8, scoped, tag = 'scoped memory for tpu_custom_call.1']
    %15 = vsyncpa [#allocation5], 0
    %s16 = scalar_lea.sflag [#allocation5], 1
    %17 = vsyncpa %s16, 0
    loop: start=0, step=1, limit=4
    $region2: #{tpu_custom_call.1} parent=1 // loop_pre_header
      _
    $region3: #{tpu_custom_call.1} parent=1 // loop_header
      %s19 = sphi 0, %s23
      %p20 = scmp.ge.s32.totalorder %s19, 4
      %s26 = sphi 0, %s38
      %s27 = sphi 0, %s34
      %s28 = sphi 0, %s26
      %s29 = sphi 0, %s27
      %s30 = sphi 0, %s28
      %s31 = sphi 0, %s29
      %s41 = sphi 0, %s43
      %s44 = sphi 0, %s41
      %s45 = sphi 0, %s44
      %s61 = sphi 0, %s45
      %s67 = sphi 0, %s69
      %s70 = sphi 0, %s67
      %s71 = sphi 0, %s70
      %s87 = sphi 0, %s71
      %s91 = sphi 0, %s91
      %s93 = sphi 0, %s91
      %s94 = sphi 0, %s93
      %s108 = sphi 0, %s94
      %s112 = sphi 0, %s112
      %s114 = sphi 0, %s112
      %s115 = sphi 0, %s114
      %s129 = sphi 0, %s115
      %s133 = sphi 0, %s133
      %s135 = sphi 0, %s133
      %s136 = sphi 0, %s135
      %s150 = sphi 0, %s136
      %s154 = sphi 0, %s154
      %s156 = sphi 0, %s154
      %s157 = sphi 0, %s156
      %s171 = sphi 0, %s157
      %s175 = sphi 0, %s175
      %s177 = sphi 0, %s175
      %s178 = sphi 0, %s177
      %s192 = sphi 0, %s178
      %s196 = sphi 0, %s196
      %s198 = sphi 0, %s196
      %s199 = sphi 0, %s198
      %s213 = sphi 0, %s199
      %s217 = sphi 0, %s217
      %s219 = sphi 0, %s217
      %s220 = sphi 0, %s219
      %s234 = sphi 0, %s220
      %s238 = sphi 0, %s238
      %s240 = sphi 0, %s238
      %s241 = sphi 0, %s240
      %s255 = sphi 0, %s241
      %s263 = sphi 0, %s265
      %s266 = sphi 0, %s263
      %s267 = sphi 0, %s266
      %s283 = sphi 0, %s267
    $region4: #{tpu_custom_call.1} parent=1 // loop_header_branch
      %22 = sbr.rel (%p20) target = $region8
    $region5: #{tpu_custom_call.1} parent=1 // loop_body
      %s24 = ssub.s32 %s19, 1
      %s25 = ssub.s32 %s19, 2
      %s32 = sadd.s32 1, %s27
      %p33 = scmp.ge.s32.totalorder %s32, 1
      %s34 = scalar_select %p33, 0, %s32
      %s35 = sadd.s32 1, %s26
      %s36 = scalar_select %p33, %s35, %s26
      %p37 = scmp.ge.s32.totalorder %s36, 2
      %s38 = scalar_select %p37, 0, %s36
      %s39 = ssub.s32 %s26, %s38
      %p40 = scmp.eq.s32.totalorder %s39, 0
      %s42 = sadd.s32 %s41, 1
      %s43 = scalar_select %p40, %s41, %s42
      %p46 = pneg %p40
      %p47 = scmp.eq.s32.totalorder %s19, 1
      %p48 = por %p46, %p47
      %p49 = scmp.ne.s32.totalorder %s41, %s44
      %p50 = scmp.eq.s32.totalorder %s19, 0
      %p51 = por %p49, %p50
      %p52 = scmp.ne.s32.totalorder %s41, %s44
      %p53 = scmp.eq.s32.totalorder %s24, 1
      %p54 = por %p52, %p53
      %p55 = scmp.ne.s32.totalorder %s44, %s45
      %p56 = scmp.eq.s32.totalorder %s24, 0
      %p57 = por %p55, %p56
      %p58 = scmp.ne.s32.totalorder %s44, %s45
      %p59 = scmp.eq.s32.totalorder %s25, 1
      %p60 = por %p58, %p59
      %p62 = scmp.ne.s32.totalorder %s45, %s61
      %p63 = scmp.eq.s32.totalorder %s25, 0
      %p64 = por %p62, %p63
      %s65 = ssub.s32 %s26, %s38
      %p66 = scmp.eq.s32.totalorder %s65, 0
      %s68 = sadd.s32 %s67, 1
      %s69 = scalar_select %p66, %s67, %s68
      %p72 = pneg %p66
      %p73 = scmp.eq.s32.totalorder %s19, 1
      %p74 = por %p72, %p73
      %p75 = scmp.ne.s32.totalorder %s67, %s70
      %p76 = scmp.eq.s32.totalorder %s19, 0
      %p77 = por %p75, %p76
      %p78 = scmp.ne.s32.totalorder %s67, %s70
      %p79 = scmp.eq.s32.totalorder %s24, 1
      %p80 = por %p78, %p79
      %p81 = scmp.ne.s32.totalorder %s70, %s71
      %p82 = scmp.eq.s32.totalorder %s24, 0
      %p83 = por %p81, %p82
      %p84 = scmp.ne.s32.totalorder %s70, %s71
      %p85 = scmp.eq.s32.totalorder %s25, 1
      %p86 = por %p84, %p85
      %p88 = scmp.ne.s32.totalorder %s71, %s87
      %p89 = scmp.eq.s32.totalorder %s25, 0
      %p90 = por %p88, %p89
      %s92 = sadd.s32 %s91, 1
      %p95 = scmp.eq.s32.totalorder %s19, 1
      %p96 = scmp.ne.s32.totalorder %s91, %s93
      %p97 = scmp.eq.s32.totalorder %s19, 0
      %p98 = por %p96, %p97
      %p99 = scmp.ne.s32.totalorder %s91, %s93
      %p100 = scmp.eq.s32.totalorder %s24, 1
      %p101 = por %p99, %p100
      %p102 = scmp.ne.s32.totalorder %s93, %s94
      %p103 = scmp.eq.s32.totalorder %s24, 0
      %p104 = por %p102, %p103
      %p105 = scmp.ne.s32.totalorder %s93, %s94
      %p106 = scmp.eq.s32.totalorder %s25, 1
      %p107 = por %p105, %p106
      %p109 = scmp.ne.s32.totalorder %s94, %s108
      %p110 = scmp.eq.s32.totalorder %s25, 0
      %p111 = por %p109, %p110
      %s113 = sadd.s32 %s112, 1
      %p116 = scmp.eq.s32.totalorder %s19, 1
      %p117 = scmp.ne.s32.totalorder %s112, %s114
      %p118 = scmp.eq.s32.totalorder %s19, 0
      %p119 = por %p117, %p118
      %p120 = scmp.ne.s32.totalorder %s112, %s114
      %p121 = scmp.eq.s32.totalorder %s24, 1
      %p122 = por %p120, %p121
      %p123 = scmp.ne.s32.totalorder %s114, %s115
      %p124 = scmp.eq.s32.totalorder %s24, 0
      %p125 = por %p123, %p124
      %p126 = scmp.ne.s32.totalorder %s114, %s115
      %p127 = scmp.eq.s32.totalorder %s25, 1
      %p128 = por %p126, %p127
      %p130 = scmp.ne.s32.totalorder %s115, %s129
      %p131 = scmp.eq.s32.totalorder %s25, 0
      %p132 = por %p130, %p131
      %s134 = sadd.s32 %s133, 1
      %p137 = scmp.eq.s32.totalorder %s19, 1
      %p138 = scmp.ne.s32.totalorder %s133, %s135
      %p139 = scmp.eq.s32.totalorder %s19, 0
      %p140 = por %p138, %p139
      %p141 = scmp.ne.s32.totalorder %s133, %s135
      %p142 = scmp.eq.s32.totalorder %s24, 1
      %p143 = por %p141, %p142
      %p144 = scmp.ne.s32.totalorder %s135, %s136
      %p145 = scmp.eq.s32.totalorder %s24, 0
      %p146 = por %p144, %p145
      %p147 = scmp.ne.s32.totalorder %s135, %s136
      %p148 = scmp.eq.s32.totalorder %s25, 1
      %p149 = por %p147, %p148
      %p151 = scmp.ne.s32.totalorder %s136, %s150
      %p152 = scmp.eq.s32.totalorder %s25, 0
      %p153 = por %p151, %p152
      %s155 = sadd.s32 %s154, 1
      %p158 = scmp.eq.s32.totalorder %s19, 1
      %p159 = scmp.ne.s32.totalorder %s154, %s156
      %p160 = scmp.eq.s32.totalorder %s19, 0
      %p161 = por %p159, %p160
      %p162 = scmp.ne.s32.totalorder %s154, %s156
      %p163 = scmp.eq.s32.totalorder %s24, 1
      %p164 = por %p162, %p163
      %p165 = scmp.ne.s32.totalorder %s156, %s157
      %p166 = scmp.eq.s32.totalorder %s24, 0
      %p167 = por %p165, %p166
      %p168 = scmp.ne.s32.totalorder %s156, %s157
      %p169 = scmp.eq.s32.totalorder %s25, 1
      %p170 = por %p168, %p169
      %p172 = scmp.ne.s32.totalorder %s157, %s171
      %p173 = scmp.eq.s32.totalorder %s25, 0
      %p174 = por %p172, %p173
      %s176 = sadd.s32 %s175, 1
      %p179 = scmp.eq.s32.totalorder %s19, 1
      %p180 = scmp.ne.s32.totalorder %s175, %s177
      %p181 = scmp.eq.s32.totalorder %s19, 0
      %p182 = por %p180, %p181
      %p183 = scmp.ne.s32.totalorder %s175, %s177
      %p184 = scmp.eq.s32.totalorder %s24, 1
      %p185 = por %p183, %p184
      %p186 = scmp.ne.s32.totalorder %s177, %s178
      %p187 = scmp.eq.s32.totalorder %s24, 0
      %p188 = por %p186, %p187
      %p189 = scmp.ne.s32.totalorder %s177, %s178
      %p190 = scmp.eq.s32.totalorder %s25, 1
      %p191 = por %p189, %p190
      %p193 = scmp.ne.s32.totalorder %s178, %s192
      %p194 = scmp.eq.s32.totalorder %s25, 0
      %p195 = por %p193, %p194
      %s197 = sadd.s32 %s196, 1
      %p200 = scmp.eq.s32.totalorder %s19, 1
      %p201 = scmp.ne.s32.totalorder %s196, %s198
      %p202 = scmp.eq.s32.totalorder %s19, 0
      %p203 = por %p201, %p202
      %p204 = scmp.ne.s32.totalorder %s196, %s198
      %p205 = scmp.eq.s32.totalorder %s24, 1
      %p206 = por %p204, %p205
      %p207 = scmp.ne.s32.totalorder %s198, %s199
      %p208 = scmp.eq.s32.totalorder %s24, 0
      %p209 = por %p207, %p208
      %p210 = scmp.ne.s32.totalorder %s198, %s199
      %p211 = scmp.eq.s32.totalorder %s25, 1
      %p212 = por %p210, %p211
      %p214 = scmp.ne.s32.totalorder %s199, %s213
      %p215 = scmp.eq.s32.totalorder %s25, 0
      %p216 = por %p214, %p215
      %s218 = sadd.s32 %s217, 1
      %p221 = scmp.eq.s32.totalorder %s19, 1
      %p222 = scmp.ne.s32.totalorder %s217, %s219
      %p223 = scmp.eq.s32.totalorder %s19, 0
      %p224 = por %p222, %p223
      %p225 = scmp.ne.s32.totalorder %s217, %s219
      %p226 = scmp.eq.s32.totalorder %s24, 1
      %p227 = por %p225, %p226
      %p228 = scmp.ne.s32.totalorder %s219, %s220
      %p229 = scmp.eq.s32.totalorder %s24, 0
      %p230 = por %p228, %p229
      %p231 = scmp.ne.s32.totalorder %s219, %s220
      %p232 = scmp.eq.s32.totalorder %s25, 1
      %p233 = por %p231, %p232
      %p235 = scmp.ne.s32.totalorder %s220, %s234
      %p236 = scmp.eq.s32.totalorder %s25, 0
      %p237 = por %p235, %p236
      %s239 = sadd.s32 %s238, 1
      %p242 = scmp.eq.s32.totalorder %s19, 1
      %p243 = scmp.ne.s32.totalorder %s238, %s240
      %p244 = scmp.eq.s32.totalorder %s19, 0
      %p245 = por %p243, %p244
      %p246 = scmp.ne.s32.totalorder %s238, %s240
      %p247 = scmp.eq.s32.totalorder %s24, 1
      %p248 = por %p246, %p247
      %p249 = scmp.ne.s32.totalorder %s240, %s241
      %p250 = scmp.eq.s32.totalorder %s24, 0
      %p251 = por %p249, %p250
      %p252 = scmp.ne.s32.totalorder %s240, %s241
      %p253 = scmp.eq.s32.totalorder %s25, 1
      %p254 = por %p252, %p253
      %p256 = scmp.ne.s32.totalorder %s241, %s255
      %p257 = scmp.eq.s32.totalorder %s25, 0
      %p258 = por %p256, %p257
      %s259 = ssub.s32 %s26, %s38
      %s260 = ssub.s32 %s27, %s34
      %s261 = sor.u32 %s259, %s260
      %p262 = scmp.eq.s32.totalorder %s261, 0
      %s264 = sadd.s32 %s263, 1
      %s265 = scalar_select %p262, %s263, %s264
      %p268 = pneg %p262
      %p269 = scmp.eq.s32.totalorder %s19, 1
      %p270 = por %p268, %p269
      %p271 = scmp.ne.s32.totalorder %s263, %s266
      %p272 = scmp.eq.s32.totalorder %s19, 0
      %p273 = por %p271, %p272
      %p274 = scmp.ne.s32.totalorder %s263, %s266
      %p275 = scmp.eq.s32.totalorder %s24, 1
      %p276 = por %p274, %p275
      %p277 = scmp.ne.s32.totalorder %s266, %s267
      %p278 = scmp.eq.s32.totalorder %s24, 0
      %p279 = por %p277, %p278
      %p280 = scmp.ne.s32.totalorder %s266, %s267
      %p281 = scmp.eq.s32.totalorder %s25, 1
      %p282 = por %p280, %p281
      %p284 = scmp.ne.s32.totalorder %s267, %s283
      %p285 = scmp.eq.s32.totalorder %s25, 0
      %p286 = por %p284, %p285
      %p287 = scmp.le.s32.totalorder 1, %s19
      %p288 = scmp.lt.s32.totalorder %s19, 3
      %p289 = pnand %p287, %p288
      %p290 = pneg %p289
      // Predicated region
      $region9: #{tpu_custom_call.1} parent=5 // pred_check
        _
      $region10: #{tpu_custom_call.1} parent=5 // pred_check_branch
        %292 = sbr.rel (%p289) target = $region12
      $region11: #{tpu_custom_call.1} parent=5 // pred_region
        %s293 = ssub.s32 %s19, 1
        // Predicated region
        $region13: #{tpu_custom_call.1} parent=11 // pred_check
          %p294 = pneg %p104
        $region14: #{tpu_custom_call.1} parent=11 // pred_check_branch
          %296 = sbr.rel (%p294) target = $region16
        $region15: #{tpu_custom_call.1} parent=11 // pred_region
          _
        $region16: #{tpu_custom_call.1} parent=11 // pred_fallthru
          _
        // Predicated region
        $region17: #{tpu_custom_call.1} parent=11 // pred_check
          %p297 = pneg %p125
        $region18: #{tpu_custom_call.1} parent=11 // pred_check_branch
          %299 = sbr.rel (%p297) target = $region20
        $region19: #{tpu_custom_call.1} parent=11 // pred_region
          _
        $region20: #{tpu_custom_call.1} parent=11 // pred_fallthru
          _
        // Predicated region
        $region21: #{tpu_custom_call.1} parent=11 // pred_check
          %p300 = pneg %p146
        $region22: #{tpu_custom_call.1} parent=11 // pred_check_branch
          %302 = sbr.rel (%p300) target = $region24
        $region23: #{tpu_custom_call.1} parent=11 // pred_region
          _
        $region24: #{tpu_custom_call.1} parent=11 // pred_fallthru
          _
        // Predicated region
        $region25: #{tpu_custom_call.1} parent=11 // pred_check
          %p303 = pneg %p167
        $region26: #{tpu_custom_call.1} parent=11 // pred_check_branch
          %305 = sbr.rel (%p303) target = $region28
        $region27: #{tpu_custom_call.1} parent=11 // pred_region
          _
        $region28: #{tpu_custom_call.1} parent=11 // pred_fallthru
          _
        // Predicated region
        $region29: #{tpu_custom_call.1} parent=11 // pred_check
          %p306 = pneg %p188
        $region30: #{tpu_custom_call.1} parent=11 // pred_check_branch
          %308 = sbr.rel (%p306) target = $region32
        $region31: #{tpu_custom_call.1} parent=11 // pred_region
          _
        $region32: #{tpu_custom_call.1} parent=11 // pred_fallthru
          _
        // Predicated region
        $region33: #{tpu_custom_call.1} parent=11 // pred_check
          %p309 = pneg %p209
        $region34: #{tpu_custom_call.1} parent=11 // pred_check_branch
          %311 = sbr.rel (%p309) target = $region36
        $region35: #{tpu_custom_call.1} parent=11 // pred_region
          _
        $region36: #{tpu_custom_call.1} parent=11 // pred_fallthru
          _
        // Predicated region
        $region37: #{tpu_custom_call.1} parent=11 // pred_check
          %p312 = pneg %p230
        $region38: #{tpu_custom_call.1} parent=11 // pred_check_branch
          %314 = sbr.rel (%p312) target = $region40
        $region39: #{tpu_custom_call.1} parent=11 // pred_region
          _
        $region40: #{tpu_custom_call.1} parent=11 // pred_fallthru
          _
        // Predicated region
        $region41: #{tpu_custom_call.1} parent=11 // pred_check
          %p315 = pneg %p251
        $region42: #{tpu_custom_call.1} parent=11 // pred_check_branch
          %317 = sbr.rel (%p315) target = $region44
        $region43: #{tpu_custom_call.1} parent=11 // pred_region
          _
        $region44: #{tpu_custom_call.1} parent=11 // pred_fallthru
          _
      $region12: #{tpu_custom_call.1} parent=5 // pred_fallthru
        _
      %p318 = scmp.lt.s32.totalorder %s19, 2
      // Predicated region
      $region45: #{tpu_custom_call.1} parent=5 // pred_check
        %p319 = pneg %p318
      $region46: #{tpu_custom_call.1} parent=5 // pred_check_branch
        %321 = sbr.rel (%p319) target = $region48
      $region47: #{tpu_custom_call.1} parent=5 // pred_region
        // Predicated region
        $region49: #{tpu_custom_call.1} parent=47 // pred_check
          %p322 = pneg %p51
        $region50: #{tpu_custom_call.1} parent=47 // pred_check_branch
          %324 = sbr.rel (%p322) target = $region52
        $region51: #{tpu_custom_call.1} parent=47 // pred_region
          %p325 = scmp.lt.s32.totalorder %s26, 1
          %s326 = scalar_select %p325, %s26, 1
          %s327 = smul.addr %s326, 8
          %s328 = scalar_lea.vmem %s0, %s327
        $region52: #{tpu_custom_call.1} parent=47 // pred_fallthru
          _
        // Predicated region
        $region53: #{tpu_custom_call.1} parent=47 // pred_check
          %p329 = pneg %p77
        $region54: #{tpu_custom_call.1} parent=47 // pred_check_branch
          %331 = sbr.rel (%p329) target = $region56
        $region55: #{tpu_custom_call.1} parent=47 // pred_region
          %p332 = scmp.lt.s32.totalorder %s26, 1
          %s333 = scalar_select %p332, %s26, 1
          %s334 = scalar_lea.vmem %s1, %s333
        $region56: #{tpu_custom_call.1} parent=47 // pred_fallthru
          _
      $region48: #{tpu_custom_call.1} parent=5 // pred_fallthru
        _
      %p335 = scmp.le.s32.totalorder 1, %s19
      %p336 = scmp.lt.s32.totalorder %s19, 3
      %p337 = pnand %p335, %p336
      %p338 = pneg %p337
      // Predicated region
      $region57: #{tpu_custom_call.1} parent=5 // pred_check
        _
      $region58: #{tpu_custom_call.1} parent=5 // pred_check_branch
        %340 = sbr.rel (%p337) target = $region60
      $region59: #{tpu_custom_call.1} parent=5 // pred_region
        %s341 = ssub.s32 %s19, 1
        %p342 = scmp.lt.s32.totalorder %s28, 1
        %s343 = scalar_select %p342, %s28, 1
        %s344 = smul.addr %s343, 8
        %s345 = scalar_lea.vmem %s0, %s344
        %p346 = pneg %p57
        %p347 = pneg %p54
        %p348 = scmp.lt.s32.totalorder %s28, 1
        %s349 = scalar_select %p348, %s28, 1
        %s350 = scalar_lea.vmem %s1, %s349
        %p351 = pneg %p83
        %p352 = pneg %p80
        %p353 = pneg %p104
        %p354 = pneg %p101
        %p355 = pneg %p125
        %p356 = pneg %p122
        %p357 = pneg %p146
        %p358 = pneg %p143
        %p359 = pneg %p167
        %p360 = pneg %p164
        %p361 = pneg %p188
        %p362 = pneg %p185
        %p363 = pneg %p209
        %p364 = pneg %p206
        %p365 = pneg %p230
        %p366 = pneg %p227
        %p367 = pneg %p251
        %p368 = pneg %p248
        %p369 = pneg %p279
        %p370 = pneg %p276
        %s371 = sand.u32 %s266, 1
        %s372 = scalar_lea.sflag [#allocation5], %s371
        %s373 = sand.u32 %s266, 1
        %s374 = smul.addr %s373, 8
        %s375 = scalar_lea.vmem [#allocation4], %s374
        %p376 = scmp.lt.s32.totalorder %s28, 1
        %s377 = scalar_select %p376, %s28, 1
        %s378 = smul.addr %s377, 8
        %s379 = scalar_lea.vmem %s0, %s378
        %p380 = scmp.lt.s32.totalorder %s28, 1
        %s381 = scalar_select %p380, %s28, 1
        %s382 = scalar_lea.vmem %s1, %s381
        %p384 = scmp.eq.s32.totalorder %s29, 0
        // Predicated region
        $region61: #{tpu_custom_call.1} parent=59 // pred_check
          %p385 = pneg %p384
        $region62: #{tpu_custom_call.1} parent=59 // pred_check_branch
          %387 = sbr.rel (%p385) target = $region64
        $region63: #{tpu_custom_call.1} parent=59 // pred_region
          %v388 = vld [vmem:[%s379] sm:$0xff]
          %389 = vxpose.xlu0.b32.start [1/16] %v388, 128
          %390 = vxpose.xlu0.b32.cont [2/16] 0.0, 128
          %391 = vxpose.xlu0.b32.cont [3/16] 0.0, 128
          %392 = vxpose.xlu0.b32.cont [4/16] 0.0, 128
          %393 = vxpose.xlu0.b32.cont [5/16] 0.0, 128
          %394 = vxpose.xlu0.b32.cont [6/16] 0.0, 128
          %395 = vxpose.xlu0.b32.cont [7/16] 0.0, 128
          %396 = vxpose.xlu0.b32.cont [8/16] 0.0, 128
          %397 = vxpose.xlu0.b32.cont [9/16] 0.0, 128
          %398 = vxpose.xlu0.b32.cont [10/16] 0.0, 128
          %399 = vxpose.xlu0.b32.cont [11/16] 0.0, 128
          %400 = vxpose.xlu0.b32.cont [12/16] 0.0, 128
          %401 = vxpose.xlu0.b32.cont [13/16] 0.0, 128
          %402 = vxpose.xlu0.b32.cont [14/16] 0.0, 128
          %403 = vxpose.xlu0.b32.cont [15/16] 0.0, 128
          %404 = vxpose.xlu0.b32.end [16/16] 0.0, 128
          %v405 = vpop.trf.xlu0
          %v406 = vpop.trf.xlu0
          %v407 = vpop.trf.xlu0
          %v408 = vpop.trf.xlu0
          %v409 = vpop.trf.xlu0
          %v410 = vpop.trf.xlu0
          %v411 = vpop.trf.xlu0
          %v412 = vpop.trf.xlu0
          %v413 = vpop.trf.xlu0
          %v414 = vpop.trf.xlu0
          %v415 = vpop.trf.xlu0
          %v416 = vpop.trf.xlu0
          %v417 = vpop.trf.xlu0
          %v418 = vpop.trf.xlu0
          %v419 = vpop.trf.xlu0
          %v420 = vpop.trf.xlu0
          %v421 = vpack.c.bf16 %v406, %v405
          %v422 = vpack.c.bf16 %v408, %v407
          %v423 = vld [vmem:[%s4] sm:$0xf]
          %v424 = vld [vmem:[%s4 + $0x4] sm:$0xf]
          %v425 = vld [vmem:[%s4 + $0x8] sm:$0xf]
          %v426 = vld [vmem:[%s4 + $0xc] sm:$0xf]
          %v427 = vld [vmem:[%s4 + $0x10] sm:$0xf]
          %v428 = vld [vmem:[%s4 + $0x14] sm:$0xf]
          %v429 = vld [vmem:[%s4 + $0x18] sm:$0xf]
          %v430 = vld [vmem:[%s4 + $0x1c] sm:$0xf]
          %v431 = vld [vmem:[%s5] sm:$0xff]
          %v432 = vld [vmem:[%s5 + $0x8] sm:$0xff]
          %v433 = vld [vmem:[%s5 + $0x10] sm:$0xff]
          %v434 = vld [vmem:[%s5 + $0x18] sm:$0xff]
          %v435 = vld [vmem:[%s5 + $0x20] sm:$0xff]
          %v436 = vld [vmem:[%s5 + $0x28] sm:$0xff]
          %v437 = vld [vmem:[%s5 + $0x30] sm:$0xff]
          %v438 = vld [vmem:[%s5 + $0x38] sm:$0xff]
          %440 = vset.pattern.permute.xlu0 0
          %441 = vperm.xlu0 %440, %v431
          %v442 = vpop.permute.xlu0 %441
          %445 = vset.pattern.permute.xlu0 0
          %446 = vperm.xlu0 %445, %v432
          %v447 = vpop.permute.xlu0 %446
          %450 = vset.pattern.permute.xlu0 0
          %451 = vperm.xlu0 %450, %v433
          %v452 = vpop.permute.xlu0 %451
          %455 = vset.pattern.permute.xlu0 0
          %456 = vperm.xlu0 %455, %v434
          %v457 = vpop.permute.xlu0 %456
          %460 = vset.pattern.permute.xlu0 0
          %461 = vperm.xlu0 %460, %v435
          %v462 = vpop.permute.xlu0 %461
          %465 = vset.pattern.permute.xlu0 0
          %466 = vperm.xlu0 %465, %v436
          %v467 = vpop.permute.xlu0 %466
          %470 = vset.pattern.permute.xlu0 0
          %471 = vperm.xlu0 %470, %v437
          %v472 = vpop.permute.xlu0 %471
          %475 = vset.pattern.permute.xlu0 0
          %476 = vperm.xlu0 %475, %v438
          %v477 = vpop.permute.xlu0 %476
          %v487 = vunpack.c.l.b16 %v423
          %v488 = vunpack.c.l.b16 %v424
          %v489 = vunpack.c.l.b16 %v425
          %v490 = vunpack.c.l.b16 %v426
          %v491 = vunpack.c.l.b16 %v427
          %v492 = vunpack.c.l.b16 %v428
          %v493 = vunpack.c.l.b16 %v429
          %v494 = vunpack.c.l.b16 %v430
          %v495 = vpack.c.b16 %v488, %v487
          %v496 = vpack.c.b16 %v490, %v489
          %v497 = vpack.c.b16 %v492, %v491
          %v498 = vpack.c.b16 %v494, %v493
          %vm499 = vcmask 261120
          %v501 = vsel %vm499, %v495, 0
          %v504 = vsel %vm499, %v496, 0
          %v507 = vsel %vm499, %v497, 0
          %v510 = vsel %vm499, %v498, 0
          %512 = vmatpush.bf16.msra.mxu0 0
          %513 = vmatpush.bf16.msra.mxu0 0
          %514 = vmatpush.bf16.msra.mxu0 0
          %515 = vmatpush.bf16.msra.mxu0 0
          %516 = vmatpush.bf16.msra.mxu0 0
          %517 = vmatpush.bf16.msra.mxu0 0
          %518 = vmatpush.bf16.msra.mxu0 %v422
          %519 = vmatpush.bf16.msra.mxu0 %v421
          %520 = vmatmul.bf16.gmra.mxu0 %v501
          %v521 = vpop.f32.mrf.mxu0
          %v522 = vadd.f32 %v442, %v521
          %v523 = vpop.f32.mrf.mxu0
          %v524 = vadd.f32 %v447, %v523
          %525 = vmatmul.bf16.gmra.mxu0 %v504
          %v526 = vpop.f32.mrf.mxu0
          %v527 = vadd.f32 %v452, %v526
          %v528 = vpop.f32.mrf.mxu0
          %v529 = vadd.f32 %v457, %v528
          %530 = vmatmul.bf16.gmra.mxu0 %v507
          %v531 = vpop.f32.mrf.mxu0
          %v532 = vadd.f32 %v462, %v531
          %v533 = vpop.f32.mrf.mxu0
          %v534 = vadd.f32 %v467, %v533
          %535 = vmatmul.bf16.gmra.mxu0 %v510
          %v536 = vpop.f32.mrf.mxu0
          %v537 = vadd.f32 %v472, %v536
          %v538 = vpop.f32.mrf.mxu0
          %v539 = vadd.f32 %v477, %v538
          %540 = vdwg.mxu0
          %v541 = vpack.c.bf16 %v522, %v522
          %v542 = vpack.c.bf16 %v524, %v524
          %v543 = vpack.c.bf16 %v527, %v527
          %v544 = vpack.c.bf16 %v529, %v529
          %vm545 = vcmask 60416
          %546 = vst.msk [vmem:[#allocation2] sm:$0xf] %vm545, %v541
          %547 = vst.msk [vmem:[#allocation2 + $0x4] sm:$0xf] %vm545, %v542
          %548 = vst.msk [vmem:[#allocation2 + $0x8] sm:$0xf] %vm545, %v543
          %549 = vst.msk [vmem:[#allocation2 + $0xc] sm:$0xf] %vm545, %v544
          %v550 = vpack.c.bf16 %v532, %v532
          %v551 = vpack.c.bf16 %v534, %v534
          %v552 = vpack.c.bf16 %v537, %v537
          %v553 = vpack.c.bf16 %v539, %v539
          %554 = vst.msk [vmem:[#allocation3] sm:$0xf] %vm545, %v550
          %555 = vst.msk [vmem:[#allocation3 + $0x4] sm:$0xf] %vm545, %v551
          %556 = vst.msk [vmem:[#allocation3 + $0x8] sm:$0xf] %vm545, %v552
          %557 = vst.msk [vmem:[#allocation3 + $0xc] sm:$0xf] %vm545, %v553
        $region64: #{tpu_custom_call.1} parent=59 // pred_fallthru
          _
        %s558 = smul.u32 %s29, 8
        %s559 = scalar_lea.vmem %s379, %s558
        %v560 = vld [vmem:[%s559] sm:$0xff]
        %561 = vxpose.xlu0.b32.start [1/16] %v560, 128
        %562 = vxpose.xlu0.b32.cont [2/16] 0.0, 128
        %563 = vxpose.xlu0.b32.cont [3/16] 0.0, 128
        %564 = vxpose.xlu0.b32.cont [4/16] 0.0, 128
        %565 = vxpose.xlu0.b32.cont [5/16] 0.0, 128
        %566 = vxpose.xlu0.b32.cont [6/16] 0.0, 128
        %567 = vxpose.xlu0.b32.cont [7/16] 0.0, 128
        %568 = vxpose.xlu0.b32.cont [8/16] 0.0, 128
        %569 = vxpose.xlu0.b32.cont [9/16] 0.0, 128
        %570 = vxpose.xlu0.b32.cont [10/16] 0.0, 128
        %571 = vxpose.xlu0.b32.cont [11/16] 0.0, 128
        %572 = vxpose.xlu0.b32.cont [12/16] 0.0, 128
        %573 = vxpose.xlu0.b32.cont [13/16] 0.0, 128
        %574 = vxpose.xlu0.b32.cont [14/16] 0.0, 128
        %575 = vxpose.xlu0.b32.cont [15/16] 0.0, 128
        %576 = vxpose.xlu0.b32.end [16/16] 0.0, 128
        %v577 = vpop.trf.xlu0
        %v578 = vpop.trf.xlu0
        %v579 = vpop.trf.xlu0
        %v580 = vpop.trf.xlu0
        %v581 = vpop.trf.xlu0
        %v582 = vpop.trf.xlu0
        %v583 = vpop.trf.xlu0
        %v584 = vpop.trf.xlu0
        %v585 = vpop.trf.xlu0
        %v586 = vpop.trf.xlu0
        %v587 = vpop.trf.xlu0
        %v588 = vpop.trf.xlu0
        %v589 = vpop.trf.xlu0
        %v590 = vpop.trf.xlu0
        %v591 = vpop.trf.xlu0
        %v592 = vpop.trf.xlu0
        %v593 = vpack.c.bf16 %v578, %v577
        %v594 = vpack.c.bf16 %v580, %v579
        %v595 = vld [vmem:[%s2] sm:$0xf]
        %v596 = vld [vmem:[%s2 + $0x4] sm:$0xf]
        %v597 = vld [vmem:[%s2 + $0x8] sm:$0xf]
        %v598 = vld [vmem:[%s2 + $0xc] sm:$0xf]
        %v599 = vld [vmem:[%s3] sm:$0xff]
        %v600 = vld [vmem:[%s3 + $0x8] sm:$0xff]
        %v601 = vld [vmem:[%s3 + $0x10] sm:$0xff]
        %v602 = vld [vmem:[%s3 + $0x18] sm:$0xff]
        %604 = vset.pattern.permute.xlu0 0
        %605 = vperm.xlu0 %604, %v599
        %v606 = vpop.permute.xlu0 %605
        %609 = vset.pattern.permute.xlu0 0
        %610 = vperm.xlu0 %609, %v600
        %v611 = vpop.permute.xlu0 %610
        %614 = vset.pattern.permute.xlu0 0
        %615 = vperm.xlu0 %614, %v601
        %v616 = vpop.permute.xlu0 %615
        %619 = vset.pattern.permute.xlu0 0
        %620 = vperm.xlu0 %619, %v602
        %v621 = vpop.permute.xlu0 %620
        %v627 = vunpack.c.l.b16 %v595
        %v628 = vunpack.c.l.b16 %v596
        %v629 = vunpack.c.l.b16 %v597
        %v630 = vunpack.c.l.b16 %v598
        %v631 = vpack.c.b16 %v628, %v627
        %v632 = vpack.c.b16 %v630, %v629
        %vm633 = vcmask 261120
        %v635 = vsel %vm633, %v631, 0
        %v638 = vsel %vm633, %v632, 0
        %640 = vmatpush.bf16.msra.mxu0 0
        %641 = vmatpush.bf16.msra.mxu0 0
        %642 = vmatpush.bf16.msra.mxu0 0
        %643 = vmatpush.bf16.msra.mxu0 0
        %644 = vmatpush.bf16.msra.mxu0 0
        %645 = vmatpush.bf16.msra.mxu0 0
        %646 = vmatpush.bf16.msra.mxu0 %v594
        %647 = vmatpush.bf16.msra.mxu0 %v593
        %648 = vmatmul.bf16.gmra.mxu0 %v635
        %v649 = vpop.f32.mrf.mxu0
        %v650 = vadd.f32 %v606, %v649
        %v651 = vpop.f32.mrf.mxu0
        %v652 = vadd.f32 %v611, %v651
        %653 = vmatmul.bf16.gmra.mxu0 %v638
        %v654 = vpop.f32.mrf.mxu0
        %v655 = vadd.f32 %v616, %v654
        %v656 = vpop.f32.mrf.mxu0
        %v657 = vadd.f32 %v621, %v656
        %658 = vdwg.mxu0
        %659 = vxpose.xlu0.b32.start [1/16] %v650, 128
        %660 = vxpose.xlu0.b32.cont [2/16] 0.0, 128
        %661 = vxpose.xlu0.b32.cont [3/16] 0.0, 128
        %662 = vxpose.xlu0.b32.cont [4/16] 0.0, 128
        %663 = vxpose.xlu0.b32.cont [5/16] 0.0, 128
        %664 = vxpose.xlu0.b32.cont [6/16] 0.0, 128
        %665 = vxpose.xlu0.b32.cont [7/16] 0.0, 128
        %666 = vxpose.xlu0.b32.cont [8/16] 0.0, 128
        %667 = vxpose.xlu0.b32.cont [9/16] 0.0, 128
        %668 = vxpose.xlu0.b32.cont [10/16] 0.0, 128
        %669 = vxpose.xlu0.b32.cont [11/16] 0.0, 128
        %670 = vxpose.xlu0.b32.cont [12/16] 0.0, 128
        %671 = vxpose.xlu0.b32.cont [13/16] 0.0, 128
        %672 = vxpose.xlu0.b32.cont [14/16] 0.0, 128
        %673 = vxpose.xlu0.b32.cont [15/16] 0.0, 128
        %674 = vxpose.xlu0.b32.end [16/16] 0.0, 128
        %v675 = vpop.trf.xlu0
        %v676 = vpop.trf.xlu0
        %v677 = vpop.trf.xlu0
        %v678 = vpop.trf.xlu0
        %v679 = vpop.trf.xlu0
        %v680 = vpop.trf.xlu0
        %v681 = vpop.trf.xlu0
        %v682 = vpop.trf.xlu0
        %v683 = vpop.trf.xlu0
        %v684 = vpop.trf.xlu0
        %v685 = vpop.trf.xlu0
        %v686 = vpop.trf.xlu0
        %v687 = vpop.trf.xlu0
        %v688 = vpop.trf.xlu0
        %v689 = vpop.trf.xlu0
        %v690 = vpop.trf.xlu0
        %691 = vxpose.xlu0.b32.start [1/16] %v652, 128
        %692 = vxpose.xlu0.b32.cont [2/16] 0.0, 128
        %693 = vxpose.xlu0.b32.cont [3/16] 0.0, 128
        %694 = vxpose.xlu0.b32.cont [4/16] 0.0, 128
        %695 = vxpose.xlu0.b32.cont [5/16] 0.0, 128
        %696 = vxpose.xlu0.b32.cont [6/16] 0.0, 128
        %697 = vxpose.xlu0.b32.cont [7/16] 0.0, 128
        %698 = vxpose.xlu0.b32.cont [8/16] 0.0, 128
        %699 = vxpose.xlu0.b32.cont [9/16] 0.0, 128
        %700 = vxpose.xlu0.b32.cont [10/16] 0.0, 128
        %701 = vxpose.xlu0.b32.cont [11/16] 0.0, 128
        %702 = vxpose.xlu0.b32.cont [12/16] 0.0, 128
        %703 = vxpose.xlu0.b32.cont [13/16] 0.0, 128
        %704 = vxpose.xlu0.b32.cont [14/16] 0.0, 128
        %705 = vxpose.xlu0.b32.cont [15/16] 0.0, 128
        %706 = vxpose.xlu0.b32.end [16/16] 0.0, 128
        %v707 = vpop.trf.xlu0
        %v708 = vpop.trf.xlu0
        %v709 = vpop.trf.xlu0
        %v710 = vpop.trf.xlu0
        %v711 = vpop.trf.xlu0
        %v712 = vpop.trf.xlu0
        %v713 = vpop.trf.xlu0
        %v714 = vpop.trf.xlu0
        %v715 = vpop.trf.xlu0
        %v716 = vpop.trf.xlu0
        %v717 = vpop.trf.xlu0
        %v718 = vpop.trf.xlu0
        %v719 = vpop.trf.xlu0
        %v720 = vpop.trf.xlu0
        %v721 = vpop.trf.xlu0
        %v722 = vpop.trf.xlu0
        %723 = vxpose.xlu0.b32.start [1/16] %v655, 128
        %724 = vxpose.xlu0.b32.cont [2/16] 0.0, 128
        %725 = vxpose.xlu0.b32.cont [3/16] 0.0, 128
        %726 = vxpose.xlu0.b32.cont [4/16] 0.0, 128
        %727 = vxpose.xlu0.b32.cont [5/16] 0.0, 128
        %728 = vxpose.xlu0.b32.cont [6/16] 0.0, 128
        %729 = vxpose.xlu0.b32.cont [7/16] 0.0, 128
        %730 = vxpose.xlu0.b32.cont [8/16] 0.0, 128
        %731 = vxpose.xlu0.b32.cont [9/16] 0.0, 128
        %732 = vxpose.xlu0.b32.cont [10/16] 0.0, 128
        %733 = vxpose.xlu0.b32.cont [11/16] 0.0, 128
        %734 = vxpose.xlu0.b32.cont [12/16] 0.0, 128
        %735 = vxpose.xlu0.b32.cont [13/16] 0.0, 128
        %736 = vxpose.xlu0.b32.cont [14/16] 0.0, 128
        %737 = vxpose.xlu0.b32.cont [15/16] 0.0, 128
        %738 = vxpose.xlu0.b32.end [16/16] 0.0, 128
        %v739 = vpop.trf.xlu0
        %v740 = vpop.trf.xlu0
        %v741 = vpop.trf.xlu0
        %v742 = vpop.trf.xlu0
        %v743 = vpop.trf.xlu0
        %v744 = vpop.trf.xlu0
        %v745 = vpop.trf.xlu0
        %v746 = vpop.trf.xlu0
        %v747 = vpop.trf.xlu0
        %v748 = vpop.trf.xlu0
        %v749 = vpop.trf.xlu0
        %v750 = vpop.trf.xlu0
        %v751 = vpop.trf.xlu0
        %v752 = vpop.trf.xlu0
        %v753 = vpop.trf.xlu0
        %v754 = vpop.trf.xlu0
        %755 = vxpose.xlu0.b32.start [1/16] %v657, 128
        %756 = vxpose.xlu0.b32.cont [2/16] 0.0, 128
        %757 = vxpose.xlu0.b32.cont [3/16] 0.0, 128
        %758 = vxpose.xlu0.b32.cont [4/16] 0.0, 128
        %759 = vxpose.xlu0.b32.cont [5/16] 0.0, 128
        %760 = vxpose.xlu0.b32.cont [6/16] 0.0, 128
        %761 = vxpose.xlu0.b32.cont [7/16] 0.0, 128
        %762 = vxpose.xlu0.b32.cont [8/16] 0.0, 128
        %763 = vxpose.xlu0.b32.cont [9/16] 0.0, 128
        %764 = vxpose.xlu0.b32.cont [10/16] 0.0, 128
        %765 = vxpose.xlu0.b32.cont [11/16] 0.0, 128
        %766 = vxpose.xlu0.b32.cont [12/16] 0.0, 128
        %767 = vxpose.xlu0.b32.cont [13/16] 0.0, 128
        %768 = vxpose.xlu0.b32.cont [14/16] 0.0, 128
        %769 = vxpose.xlu0.b32.cont [15/16] 0.0, 128
        %770 = vxpose.xlu0.b32.end [16/16] 0.0, 128
        %v771 = vpop.trf.xlu0
        %v772 = vpop.trf.xlu0
        %v773 = vpop.trf.xlu0
        %v774 = vpop.trf.xlu0
        %v775 = vpop.trf.xlu0
        %v776 = vpop.trf.xlu0
        %v777 = vpop.trf.xlu0
        %v778 = vpop.trf.xlu0
        %v779 = vpop.trf.xlu0
        %v780 = vpop.trf.xlu0
        %v781 = vpop.trf.xlu0
        %v782 = vpop.trf.xlu0
        %v783 = vpop.trf.xlu0
        %v784 = vpop.trf.xlu0
        %v785 = vpop.trf.xlu0
        %v786 = vpop.trf.xlu0
        %v787 = vpack.c.bf16 %v675, %v675
        %v788 = vpack.c.bf16 %v707, %v707
        %v789 = vpack.c.bf16 %v739, %v739
        %v790 = vpack.c.bf16 %v771, %v771
        %v791 = vld [vmem:[%s382] sm:$0x1]
        %v792 = vld [vmem:[#allocation2] sm:$0xf]
        %v793 = vld [vmem:[#allocation2 + $0x4] sm:$0xf]
        %v794 = vld [vmem:[#allocation2 + $0x8] sm:$0xf]
        %v795 = vld [vmem:[#allocation2 + $0xc] sm:$0xf]
        %v797 = vperm.slane %v791, 0
        %vm799 = vcmask 64512
        %v801 = vsel %vm799, %v787, 0
        %vm803 = vcmask 1043456
        %v805 = vsel %vm803, %v792, 0
        %807 = vmatpush.bf16.msra.mxu0 0
        %808 = vmatpush.bf16.msra.mxu0 0
        %809 = vmatpush.bf16.msra.mxu0 0
        %810 = vmatpush.bf16.msra.mxu0 0
        %811 = vmatpush.bf16.msra.mxu0 0
        %812 = vmatpush.bf16.msra.mxu0 0
        %813 = vmatpush.bf16.msra.mxu0 0
        %814 = vmatpush.bf16.msra.mxu0 %v805
        %815 = vmatmul.bf16.gmra.mxu0 %v801
        %v816 = vpop.f32.mrf.mxu0
        %v817 = vadd.f32 %v797, %v816
        %v818 = vpop.f32.mrf.mxu0
        %819 = vdwg.mxu0
        %v821 = vsel %vm799, %v788, 0
        %v824 = vsel %vm803, %v793, 0
        %826 = vmatpush.bf16.msra.mxu0 0
        %827 = vmatpush.bf16.msra.mxu0 0
        %828 = vmatpush.bf16.msra.mxu0 0
        %829 = vmatpush.bf16.msra.mxu0 0
        %830 = vmatpush.bf16.msra.mxu0 0
        %831 = vmatpush.bf16.msra.mxu0 0
        %832 = vmatpush.bf16.msra.mxu0 0
        %833 = vmatpush.bf16.msra.mxu0 %v824
        %834 = vmatmul.bf16.gmra.mxu0 %v821
        %v835 = vpop.f32.mrf.mxu0
        %v836 = vadd.f32 %v797, %v835
        %v837 = vpop.f32.mrf.mxu0
        %838 = vdwg.mxu0
        %v840 = vsel %vm799, %v789, 0
        %v843 = vsel %vm803, %v794, 0
        %845 = vmatpush.bf16.msra.mxu0 0
        %846 = vmatpush.bf16.msra.mxu0 0
        %847 = vmatpush.bf16.msra.mxu0 0
        %848 = vmatpush.bf16.msra.mxu0 0
        %849 = vmatpush.bf16.msra.mxu0 0
        %850 = vmatpush.bf16.msra.mxu0 0
        %851 = vmatpush.bf16.msra.mxu0 0
        %852 = vmatpush.bf16.msra.mxu0 %v843
        %853 = vmatmul.bf16.gmra.mxu0 %v840
        %v854 = vpop.f32.mrf.mxu0
        %v855 = vadd.f32 %v797, %v854
        %v856 = vpop.f32.mrf.mxu0
        %857 = vdwg.mxu0
        %v859 = vsel %vm799, %v790, 0
        %v862 = vsel %vm803, %v795, 0
        %864 = vmatpush.bf16.msra.mxu0 0
        %865 = vmatpush.bf16.msra.mxu0 0
        %866 = vmatpush.bf16.msra.mxu0 0
        %867 = vmatpush.bf16.msra.mxu0 0
        %868 = vmatpush.bf16.msra.mxu0 0
        %869 = vmatpush.bf16.msra.mxu0 0
        %870 = vmatpush.bf16.msra.mxu0 0
        %871 = vmatpush.bf16.msra.mxu0 %v862
        %872 = vmatmul.bf16.gmra.mxu0 %v859
        %v873 = vpop.f32.mrf.mxu0
        %v874 = vadd.f32 %v797, %v873
        %v875 = vpop.f32.mrf.mxu0
        %876 = vdwg.mxu0
        %v877 = vsel %vm799, %v817, -inf
        %878 = vmax.xlane.f32.xlu0 %v877
        %v879 = vpop.xlane.xlu0 %878
        %v880 = vsel %vm799, %v836, -inf
        %881 = vmax.xlane.f32.xlu0 %v880
        %v882 = vpop.xlane.xlu0 %881
        %v883 = vsel %vm799, %v855, -inf
        %884 = vmax.xlane.f32.xlu0 %v883
        %v885 = vpop.xlane.xlu0 %884
        %v886 = vsel %vm799, %v874, -inf
        %887 = vmax.xlane.f32.xlu0 %v886
        %v888 = vpop.xlane.xlu0 %887
        %v889 = vsub.f32 %v817, %v879
        %v890 = vsub.f32 %v836, %v882
        %v891 = vsub.f32 %v855, %v885
        %v892 = vsub.f32 %v874, %v888
        %v893 = vmul.f32 %v889, 1.442695
        %v894 = vpow.pop %v893
        %v895 = vmul.f32 %v890, 1.442695
        %v896 = vpow.pop %v895
        %v897 = vmul.f32 %v891, 1.442695
        %v898 = vpow.pop %v897
        %v899 = vmul.f32 %v892, 1.442695
        %v900 = vpow.pop %v899
        %v901 = vsel %vm799, %v894, 0.0
        %902 = vadd.xlane.f32.xlu0 %v901
        %v903 = vpop.xlane.xlu0 %902
        %v904 = vsel %vm799, %v896, 0.0
        %905 = vadd.xlane.f32.xlu0 %v904
        %v906 = vpop.xlane.xlu0 %905
        %v907 = vsel %vm799, %v898, 0.0
        %908 = vadd.xlane.f32.xlu0 %v907
        %v909 = vpop.xlane.xlu0 %908
        %v910 = vsel %vm799, %v900, 0.0
        %911 = vadd.xlane.f32.xlu0 %v910
        %v912 = vpop.xlane.xlu0 %911
        %v913 = vrcp.pop %v903
        %v914 = vrcp.pop %v906
        %v915 = vrcp.pop %v909
        %v916 = vrcp.pop %v912
        %v917 = vmul.f32 %v894, %v913
        %v918 = vmul.f32 %v896, %v914
        %v919 = vmul.f32 %v898, %v915
        %v920 = vmul.f32 %v900, %v916
        %v921 = vpack.c.bf16 %v917, %v917
        %v922 = vpack.c.bf16 %v918, %v918
        %v923 = vpack.c.bf16 %v919, %v919
        %v924 = vpack.c.bf16 %v920, %v920
        %v925 = vld [vmem:[#allocation3] sm:$0xf]
        %v926 = vld [vmem:[#allocation3 + $0x4] sm:$0xf]
        %v927 = vld [vmem:[#allocation3 + $0x8] sm:$0xf]
        %v928 = vld [vmem:[#allocation3 + $0xc] sm:$0xf]
        %v930 = vsel %vm799, %v921, 0
        %v933 = vsel %vm799, %v925, 0
        %935 = vmatpush.bf16.xpose.msra.mxu0 0
        %936 = vmatpush.bf16.xpose.msra.mxu0 0
        %937 = vmatpush.bf16.xpose.msra.mxu0 0
        %938 = vmatpush.bf16.xpose.msra.mxu0 0
        %939 = vmatpush.bf16.xpose.msra.mxu0 0
        %940 = vmatpush.bf16.xpose.msra.mxu0 0
        %941 = vmatpush.bf16.xpose.msra.mxu0 0
        %942 = vmatpush.bf16.xpose.msra.mxu0 %v933
        %943 = vmatmul.bf16.gmra.mxu0 %v930
        %v944 = vpop.f32.mrf.mxu0
        %v945 = vadd.f32 0.0, %v944
        %v946 = vpop.f32.mrf.mxu0
        %947 = vdwg.mxu0
        %v949 = vsel %vm799, %v922, 0
        %v952 = vsel %vm799, %v926, 0
        %954 = vmatpush.bf16.xpose.msra.mxu0 0
        %955 = vmatpush.bf16.xpose.msra.mxu0 0
        %956 = vmatpush.bf16.xpose.msra.mxu0 0
        %957 = vmatpush.bf16.xpose.msra.mxu0 0
        %958 = vmatpush.bf16.xpose.msra.mxu0 0
        %959 = vmatpush.bf16.xpose.msra.mxu0 0
        %960 = vmatpush.bf16.xpose.msra.mxu0 0
        %961 = vmatpush.bf16.xpose.msra.mxu0 %v952
        %962 = vmatmul.bf16.gmra.mxu0 %v949
        %v963 = vpop.f32.mrf.mxu0
        %v964 = vadd.f32 0.0, %v963
        %v965 = vpop.f32.mrf.mxu0
        %966 = vdwg.mxu0
        %v968 = vsel %vm799, %v923, 0
        %v971 = vsel %vm799, %v927, 0
        %973 = vmatpush.bf16.xpose.msra.mxu0 0
        %974 = vmatpush.bf16.xpose.msra.mxu0 0
        %975 = vmatpush.bf16.xpose.msra.mxu0 0
        %976 = vmatpush.bf16.xpose.msra.mxu0 0
        %977 = vmatpush.bf16.xpose.msra.mxu0 0
        %978 = vmatpush.bf16.xpose.msra.mxu0 0
        %979 = vmatpush.bf16.xpose.msra.mxu0 0
        %980 = vmatpush.bf16.xpose.msra.mxu0 %v971
        %981 = vmatmul.bf16.gmra.mxu0 %v968
        %v982 = vpop.f32.mrf.mxu0
        %v983 = vadd.f32 0.0, %v982
        %v984 = vpop.f32.mrf.mxu0
        %985 = vdwg.mxu0
        %v987 = vsel %vm799, %v924, 0
        %v990 = vsel %vm799, %v928, 0
        %992 = vmatpush.bf16.xpose.msra.mxu0 0
        %993 = vmatpush.bf16.xpose.msra.mxu0 0
        %994 = vmatpush.bf16.xpose.msra.mxu0 0
        %995 = vmatpush.bf16.xpose.msra.mxu0 0
        %996 = vmatpush.bf16.xpose.msra.mxu0 0
        %997 = vmatpush.bf16.xpose.msra.mxu0 0
        %998 = vmatpush.bf16.xpose.msra.mxu0 0
        %999 = vmatpush.bf16.xpose.msra.mxu0 %v990
        %1000 = vmatmul.bf16.gmra.mxu0 %v987
        %v1001 = vpop.f32.mrf.mxu0
        %v1002 = vadd.f32 0.0, %v1001
        %v1003 = vpop.f32.mrf.mxu0
        %1004 = vdwg.mxu0
        %1005 = vxpose.xlu0.b32.start [1/16] %v945, 128
        %1006 = vxpose.xlu0.b32.cont [2/16] 0.0, 128
        %1007 = vxpose.xlu0.b32.cont [3/16] 0.0, 128
        %1008 = vxpose.xlu0.b32.cont [4/16] 0.0, 128
        %1009 = vxpose.xlu0.b32.cont [5/16] 0.0, 128
        %1010 = vxpose.xlu0.b32.cont [6/16] 0.0, 128
        %1011 = vxpose.xlu0.b32.cont [7/16] 0.0, 128
        %1012 = vxpose.xlu0.b32.cont [8/16] 0.0, 128
        %1013 = vxpose.xlu0.b32.cont [9/16] 0.0, 128
        %1014 = vxpose.xlu0.b32.cont [10/16] 0.0, 128
        %1015 = vxpose.xlu0.b32.cont [11/16] 0.0, 128
        %1016 = vxpose.xlu0.b32.cont [12/16] 0.0, 128
        %1017 = vxpose.xlu0.b32.cont [13/16] 0.0, 128
        %1018 = vxpose.xlu0.b32.cont [14/16] 0.0, 128
        %1019 = vxpose.xlu0.b32.cont [15/16] 0.0, 128
        %1020 = vxpose.xlu0.b32.end [16/16] 0.0, 128
        %v1021 = vpop.trf.xlu0
        %v1022 = vpop.trf.xlu0
        %v1023 = vpop.trf.xlu0
        %v1024 = vpop.trf.xlu0
        %v1025 = vpop.trf.xlu0
        %v1026 = vpop.trf.xlu0
        %v1027 = vpop.trf.xlu0
        %v1028 = vpop.trf.xlu0
        %v1029 = vpop.trf.xlu0
        %v1030 = vpop.trf.xlu0
        %v1031 = vpop.trf.xlu0
        %v1032 = vpop.trf.xlu0
        %v1033 = vpop.trf.xlu0
        %v1034 = vpop.trf.xlu0
        %v1035 = vpop.trf.xlu0
        %v1036 = vpop.trf.xlu0
        %1037 = vxpose.xlu0.b32.start [1/16] %v964, 128
        %1038 = vxpose.xlu0.b32.cont [2/16] 0.0, 128
        %1039 = vxpose.xlu0.b32.cont [3/16] 0.0, 128
        %1040 = vxpose.xlu0.b32.cont [4/16] 0.0, 128
        %1041 = vxpose.xlu0.b32.cont [5/16] 0.0, 128
        %1042 = vxpose.xlu0.b32.cont [6/16] 0.0, 128
        %1043 = vxpose.xlu0.b32.cont [7/16] 0.0, 128
        %1044 = vxpose.xlu0.b32.cont [8/16] 0.0, 128
        %1045 = vxpose.xlu0.b32.cont [9/16] 0.0, 128
        %1046 = vxpose.xlu0.b32.cont [10/16] 0.0, 128
        %1047 = vxpose.xlu0.b32.cont [11/16] 0.0, 128
        %1048 = vxpose.xlu0.b32.cont [12/16] 0.0, 128
        %1049 = vxpose.xlu0.b32.cont [13/16] 0.0, 128
        %1050 = vxpose.xlu0.b32.cont [14/16] 0.0, 128
        %1051 = vxpose.xlu0.b32.cont [15/16] 0.0, 128
        %1052 = vxpose.xlu0.b32.end [16/16] 0.0, 128
        %v1053 = vpop.trf.xlu0
        %v1054 = vpop.trf.xlu0
        %v1055 = vpop.trf.xlu0
        %v1056 = vpop.trf.xlu0
        %v1057 = vpop.trf.xlu0
        %v1058 = vpop.trf.xlu0
        %v1059 = vpop.trf.xlu0
        %v1060 = vpop.trf.xlu0
        %v1061 = vpop.trf.xlu0
        %v1062 = vpop.trf.xlu0
        %v1063 = vpop.trf.xlu0
        %v1064 = vpop.trf.xlu0
        %v1065 = vpop.trf.xlu0
        %v1066 = vpop.trf.xlu0
        %v1067 = vpop.trf.xlu0
        %v1068 = vpop.trf.xlu0
        %1069 = vxpose.xlu0.b32.start [1/16] %v983, 128
        %1070 = vxpose.xlu0.b32.cont [2/16] 0.0, 128
        %1071 = vxpose.xlu0.b32.cont [3/16] 0.0, 128
        %1072 = vxpose.xlu0.b32.cont [4/16] 0.0, 128
        %1073 = vxpose.xlu0.b32.cont [5/16] 0.0, 128
        %1074 = vxpose.xlu0.b32.cont [6/16] 0.0, 128
        %1075 = vxpose.xlu0.b32.cont [7/16] 0.0, 128
        %1076 = vxpose.xlu0.b32.cont [8/16] 0.0, 128
        %1077 = vxpose.xlu0.b32.cont [9/16] 0.0, 128
        %1078 = vxpose.xlu0.b32.cont [10/16] 0.0, 128
        %1079 = vxpose.xlu0.b32.cont [11/16] 0.0, 128
        %1080 = vxpose.xlu0.b32.cont [12/16] 0.0, 128
        %1081 = vxpose.xlu0.b32.cont [13/16] 0.0, 128
        %1082 = vxpose.xlu0.b32.cont [14/16] 0.0, 128
        %1083 = vxpose.xlu0.b32.cont [15/16] 0.0, 128
        %1084 = vxpose.xlu0.b32.end [16/16] 0.0, 128
        %v1085 = vpop.trf.xlu0
        %v1086 = vpop.trf.xlu0
        %v1087 = vpop.trf.xlu0
        %v1088 = vpop.trf.xlu0
        %v1089 = vpop.trf.xlu0
        %v1090 = vpop.trf.xlu0
        %v1091 = vpop.trf.xlu0
        %v1092 = vpop.trf.xlu0
        %v1093 = vpop.trf.xlu0
        %v1094 = vpop.trf.xlu0
        %v1095 = vpop.trf.xlu0
        %v1096 = vpop.trf.xlu0
        %v1097 = vpop.trf.xlu0
        %v1098 = vpop.trf.xlu0
        %v1099 = vpop.trf.xlu0
        %v1100 = vpop.trf.xlu0
        %1101 = vxpose.xlu0.b32.start [1/16] %v1002, 128
        %1102 = vxpose.xlu0.b32.cont [2/16] 0.0, 128
        %1103 = vxpose.xlu0.b32.cont [3/16] 0.0, 128
        %1104 = vxpose.xlu0.b32.cont [4/16] 0.0, 128
        %1105 = vxpose.xlu0.b32.cont [5/16] 0.0, 128
        %1106 = vxpose.xlu0.b32.cont [6/16] 0.0, 128
        %1107 = vxpose.xlu0.b32.cont [7/16] 0.0, 128
        %1108 = vxpose.xlu0.b32.cont [8/16] 0.0, 128
        %1109 = vxpose.xlu0.b32.cont [9/16] 0.0, 128
        %1110 = vxpose.xlu0.b32.cont [10/16] 0.0, 128
        %1111 = vxpose.xlu0.b32.cont [11/16] 0.0, 128
        %1112 = vxpose.xlu0.b32.cont [12/16] 0.0, 128
        %1113 = vxpose.xlu0.b32.cont [13/16] 0.0, 128
        %1114 = vxpose.xlu0.b32.cont [14/16] 0.0, 128
        %1115 = vxpose.xlu0.b32.cont [15/16] 0.0, 128
        %1116 = vxpose.xlu0.b32.end [16/16] 0.0, 128
        %v1117 = vpop.trf.xlu0
        %v1118 = vpop.trf.xlu0
        %v1119 = vpop.trf.xlu0
        %v1120 = vpop.trf.xlu0
        %v1121 = vpop.trf.xlu0
        %v1122 = vpop.trf.xlu0
        %v1123 = vpop.trf.xlu0
        %v1124 = vpop.trf.xlu0
        %v1125 = vpop.trf.xlu0
        %v1126 = vpop.trf.xlu0
        %v1127 = vpop.trf.xlu0
        %v1128 = vpop.trf.xlu0
        %v1129 = vpop.trf.xlu0
        %v1130 = vpop.trf.xlu0
        %v1131 = vpop.trf.xlu0
        %v1132 = vpop.trf.xlu0
        %1133 = vxpose.xlu0.b32.start [1/16] %v1021, 128
        %1134 = vxpose.xlu0.b32.cont [2/16] %v1053, 128
        %1135 = vxpose.xlu0.b32.cont [3/16] %v1085, 128
        %1136 = vxpose.xlu0.b32.cont [4/16] %v1117, 128
        %1137 = vxpose.xlu0.b32.cont [5/16] 0.0, 128
        %1138 = vxpose.xlu0.b32.cont [6/16] 0.0, 128
        %1139 = vxpose.xlu0.b32.cont [7/16] 0.0, 128
        %1140 = vxpose.xlu0.b32.cont [8/16] 0.0, 128
        %1141 = vxpose.xlu0.b32.cont [9/16] 0.0, 128
        %1142 = vxpose.xlu0.b32.cont [10/16] 0.0, 128
        %1143 = vxpose.xlu0.b32.cont [11/16] 0.0, 128
        %1144 = vxpose.xlu0.b32.cont [12/16] 0.0, 128
        %1145 = vxpose.xlu0.b32.cont [13/16] 0.0, 128
        %1146 = vxpose.xlu0.b32.cont [14/16] 0.0, 128
        %1147 = vxpose.xlu0.b32.cont [15/16] 0.0, 128
        %1148 = vxpose.xlu0.b32.end [16/16] 0.0, 128
        %v1149 = vpop.trf.xlu0
        %v1150 = vpop.trf.xlu0
        %v1151 = vpop.trf.xlu0
        %v1152 = vpop.trf.xlu0
        %v1153 = vpop.trf.xlu0
        %v1154 = vpop.trf.xlu0
        %v1155 = vpop.trf.xlu0
        %v1156 = vpop.trf.xlu0
        %v1157 = vpop.trf.xlu0
        %v1158 = vpop.trf.xlu0
        %v1159 = vpop.trf.xlu0
        %v1160 = vpop.trf.xlu0
        %v1161 = vpop.trf.xlu0
        %v1162 = vpop.trf.xlu0
        %v1163 = vpop.trf.xlu0
        %v1164 = vpop.trf.xlu0
        %v1165 = vpack.c.bf16 %v1149, %v1149
        %v1166 = vld [vmem:[%s7] sm:$0x1]
        %v1168 = vperm.slane %v1166, 0
        %v1170 = vadd.f32 %v560, %v1168
        %v1171 = vld [vmem:[%s6] sm:$0xf]
        %v1172 = vld [vmem:[%s6 + $0x4] sm:$0xf]
        %v1173 = vld [vmem:[%s6 + $0x8] sm:$0xf]
        %v1174 = vld [vmem:[%s6 + $0xc] sm:$0xf]
        %v1179 = vunpack.c.l.b16 %v1171
        %v1180 = vunpack.c.l.b16 %v1172
        %v1181 = vunpack.c.l.b16 %v1173
        %v1182 = vunpack.c.l.b16 %v1174
        %v1183 = vpack.c.b16 %v1180, %v1179
        %v1184 = vpack.c.b16 %v1182, %v1181
        %v1188 = vsel %vm633, %v1165, 0
        %1190 = vmatpush.bf16.msra.mxu0 0
        %1191 = vmatpush.bf16.msra.mxu0 0
        %1192 = vmatpush.bf16.msra.mxu0 0
        %1193 = vmatpush.bf16.msra.mxu0 0
        %1194 = vmatpush.bf16.msra.mxu0 0
        %1195 = vmatpush.bf16.msra.mxu0 0
        %1196 = vmatpush.bf16.msra.mxu0 %v1184
        %1197 = vmatpush.bf16.msra.mxu0 %v1183
        %1198 = vmatmul.bf16.gmra.mxu0 %v1188
        %v1199 = vpop.f32.mrf.mxu0
        %v1200 = vadd.f32 0.0, %v1199
        %v1201 = vpop.f32.mrf.mxu0
        %1202 = vdwg.mxu0
        %v1203 = vadd.f32 %v1170, %v1200
        %v1204 = vsel %vm633, %v1203, 0.0
        %1205 = vadd.xlane.f32.xlu0 %v1204
        %v1206 = vpop.xlane.xlu0 %1205
        %v1207 = vrcp.pop 32.0
        %v1208 = vmul.f32 32.0, %v1207
        %v1209 = vsub.f32 1.0, %v1208
        %v1210 = vmul.f32 %v1207, %v1209
        %v1211 = vadd.f32 %v1207, %v1210
        %vm1212 = vweird.f32 %v1207
        %v1213 = vsel %vm1212, %v1207, %v1211
        %v1214 = vmul.f32 %v1206, %v1213
        %v1215 = vsub.f32 %v1203, %v1214
        %v1216 = vmul.f32 %v1215, %v1215
        %v1217 = vsel %vm633, %v1216, 0.0
        %1218 = vadd.xlane.f32.xlu0 %v1217
        %v1219 = vpop.xlane.xlu0 %1218
        %v1220 = vmul.f32 %v1219, %v1213
        %v1221 = vadd.f32 %v1220, 1e-12
        %v1222 = vrsqrt.pop %v1221
        %v1223 = vmul.f32 %v1222, %v1221
        %v1224 = vmul.f32 %v1223, %v1222
        %v1225 = vmul.f32 0.5, %v1224
        %v1226 = vsub.f32 1.5, %v1225
        %v1227 = vmul.f32 %v1222, %v1226
        %vm1228 = vweird.f32 %v1221
        %vm1229 = vweird.f32 %v1222
        %vm1230 = vmor %vm1228, %vm1229
        %v1231 = vsel %vm1230, %v1222, %v1227
        %v1232 = vmul.f32 %v1215, %v1231
        %v1233 = vld [vmem:[%s8] sm:$0x1]
        %v1235 = vperm.slane %v1233, 0
        %v1237 = vmul.f32 %v1232, %v1235
        %v1238 = vld [vmem:[%s9] sm:$0x1]
        %v1240 = vperm.slane %v1238, 0
        %v1242 = vadd.f32 %v1237, %v1240
        %1243 = vst.msk [vmem:[%s375] sm:$0xff] %vm633, %v1242
        %s1244 = sand.u32 %s266, 1
        %s1245 = scalar_lea.sflag [#allocation5], %s1244
        %s1246 = sand.u32 %s266, 1
        %s1247 = smul.addr %s1246, 8
        %s1248 = scalar_lea.vmem [#allocation4], %s1247
        // Predicated region
        $region65: #{tpu_custom_call.1} parent=59 // pred_check
          %p1249 = pneg %p276
        $region66: #{tpu_custom_call.1} parent=59 // pred_check_branch
          %1251 = sbr.rel (%p1249) target = $region68
        $region67: #{tpu_custom_call.1} parent=59 // pred_region
          %1253 = vsyncadd %s1245, 0
          %s1254 = sadd.s32 %s29, %s28
          %s1255 = smul.addr %s1254, 8
          %s1256 = scalar_lea.hbm %s10, %s1255
          %s1258 = sshll.u32 %s1248, 4
          %s1259 = int_to_ptr.vmem [resolvable:$true] %s1258
          %s1260 = sshll.u32 %s1256, 4
          %s1261 = int_to_ptr.hbm [resolvable:$true] %s1260
          %1263 = dma.vmem_to_hbm [thread:$0]  %s1259, 128, %s1261, %s1245
        $region68: #{tpu_custom_call.1} parent=59 // pred_fallthru
          _
      $region60: #{tpu_custom_call.1} parent=5 // pred_fallthru
        _
      %p1264 = scmp.le.s32.totalorder 2, %s19
      // Predicated region
      $region69: #{tpu_custom_call.1} parent=5 // pred_check
        %p1265 = pneg %p1264
      $region70: #{tpu_custom_call.1} parent=5 // pred_check_branch
        %1267 = sbr.rel (%p1265) target = $region72
      $region71: #{tpu_custom_call.1} parent=5 // pred_region
        %s1268 = ssub.s32 %s19, 2
        // Predicated region
        $region73: #{tpu_custom_call.1} parent=71 // pred_check
          %p1269 = pneg %p282
        $region74: #{tpu_custom_call.1} parent=71 // pred_check_branch
          %1271 = sbr.rel (%p1269) target = $region76
        $region75: #{tpu_custom_call.1} parent=71 // pred_region
          %s1272 = sand.u32 %s267, 1
          %s1273 = scalar_lea.sflag [#allocation5], %s1272
          %s1274 = sand.u32 %s267, 1
          %s1275 = smul.addr %s1274, 8
          %s1276 = scalar_lea.vmem [#allocation4], %s1275
          %1278 = dma.done %s1273, 128
        $region76: #{tpu_custom_call.1} parent=71 // pred_fallthru
          _
      $region72: #{tpu_custom_call.1} parent=5 // pred_fallthru
        _
    $region6: #{tpu_custom_call.1} parent=1 // loop_footer
      %s23 = sadd.s32 1, %s19
    $region7: #{tpu_custom_call.1} parent=1 // loop_footer_branch
      %18 = sbr.rel target = $region3
    $region8: #{tpu_custom_call.1} parent=1 // loop_exit
      _
    %1279 = vsyncpa [#allocation5], 1
    %s1280 = scalar_lea.sflag [#allocation5], 1
    %1281 = vsyncpa %s1280, 1

</llo_original>
